<compile_context>
chip_gen: v7x
topology: tpu7x:2x2x1
jax: 0.10.0
libtpu: 0.0.40
codegen_flags: <defaults>
</compile_context>

<pallas_src>
import functools

import jax
import jax.numpy as jnp
from jax import lax
from jax.experimental import pallas as pl
from jax.experimental.pallas import tpu as pltpu

EPS = 1e-5


def _band_weights(w_oihw, W):
    """torch conv weight (Cout, Cin, 3, 3) -> 3 block-banded (W*C, W*C) mats.

    band[dy][xin*C + ci, xout*C + co] = w[co, ci, dy, xin - xout + 1] when
    xin - xout + 1 in {0, 1, 2}, else 0.  The dx taps and the SAME-padding
    W-edge zeros are folded into the band, so the kernel only needs one
    K = W*C matmul per row tap dy.
    """
    Cout, Cin, KH, KW = w_oihw.shape
    assert KH == 3 and KW == 3 and Cout == Cin
    C = Cin
    m = jnp.transpose(w_oihw, (2, 3, 1, 0))            # (3, 3, Cin, Cout)
    xin = jnp.arange(W)[:, None]
    xout = jnp.arange(W)[None, :]
    dx = xin - xout + 1                                # (W, W)
    valid = (dx >= 0) & (dx <= 2)
    dxc = jnp.clip(dx, 0, 2)

    def one(dy):
        blocks = m[dy][dxc]                            # (W, W, Cin, Cout)
        blocks = jnp.where(valid[:, :, None, None], blocks, 0.0)
        # rows indexed by xin*C+ci, cols by xout*C+co
        return jnp.transpose(blocks, (0, 2, 1, 3)).reshape(W * C, W * C)

    return jnp.stack([one(dy) for dy in range(3)], axis=0)   # (3, W*C, W*C)


def _chan_replicate_matrix(W, C):
    """(W*C, W*C) 0/1 matrix: (v @ R)[x*C+c] = sum_x' v[x'*C+c] — per-channel
    reduction over the W lane groups, replicated back lane-dense."""
    i = jnp.arange(W * C)
    return (i[:, None] % C == i[None, :] % C).astype(jnp.float32)


def _basic_block_kernel(x_ref, band1_ref, band2_ref, g1_ref, bt1_ref,
                        g2_ref, bt2_ref, rep_ref, o_ref, pad_ref,
                        *, N, C, H, W):
    WC = W * C
    R = N * H
    inv_count = 1.0 / float(N * H * W)

    # Zero only the H-halo rows of the padded scratch, once (reused by both
    # convs; W-edge padding is folded into the banded weights).
    pad_ref[:, 0:1, :] = jnp.zeros((N, 1, WC), pad_ref.dtype)
    pad_ref[:, H + 1:H + 2, :] = jnp.zeros((N, 1, WC), pad_ref.dtype)

    def conv3x3(act, band_ref):
        # Stage the activation into the interior rows of the padded scratch.
        pad_ref[:, 1:H + 1, :] = act.reshape(N, H, WC)

        # 3 deep-K (K = W*C) MXU matmuls, bf16 operands, f32 accumulation.
        def tap(dy):
            lhs = pad_ref[:, dy:dy + H, :].reshape(R, WC).astype(jnp.bfloat16)
            return jnp.dot(lhs, band_ref[dy],
                           preferred_element_type=jnp.float32)

        acc = tap(0)
        acc = acc + tap(1)
        acc = acc + tap(2)
        return acc                                     # (N*H, W*C) f32

    def batchnorm(y, gamma, beta):
        # One-pass train-mode batch stats (sum & sum-of-squares), reduced per
        # channel and replicated lane-dense via a tiny matmul with rep_ref.
        s1 = jnp.sum(y, axis=0, keepdims=True)          # (1, W*C)
        s2 = jnp.sum(y * y, axis=0, keepdims=True)      # (1, W*C)
        tot1 = jnp.dot(s1, rep_ref[...], preferred_element_type=jnp.float32)
        tot2 = jnp.dot(s2, rep_ref[...], preferred_element_type=jnp.float32)
        mean = tot1 * inv_count
        var = tot2 * inv_count - mean * mean
        scale = gamma * lax.rsqrt(var + EPS)            # (1, W*C)
        shift = beta - mean * scale
        return y * scale + shift                        # single scale+shift pass

    x = x_ref[...]                                      # f32, lane-dense (N*H, W*C)
    h = conv3x3(x, band1_ref)                           # conv bias dropped: dead under train BN
    h = jnp.maximum(batchnorm(h, g1_ref[...], bt1_ref[...]), 0.0)   # ac_func = ReLU
    h = conv3x3(h, band2_ref)
    h = batchnorm(h, g2_ref[...], bt2_ref[...])
    o_ref[...] = jnp.maximum(x + h, 0.0).astype(o_ref.dtype)        # residual + final ReLU


def basic_block_packed(x_packed, params, *, N, C, H, W):
    """x_packed: (N*H, W*C) f32 (lane-dense NHWC packing).  Keep this layout
    across chained BasicBlocks to avoid per-block NCHW<->NHWC transposes."""
    WC = W * C
    w1, b1, g1, bt1, w2, b2, g2, bt2 = params
    del b1, b2   # conv bias is exactly cancelled by train-mode BatchNorm

    band1 = _band_weights(w1, W).astype(jnp.bfloat16)   # (3, WC, WC)
    band2 = _band_weights(w2, W).astype(jnp.bfloat16)
    rep = _chan_replicate_matrix(W, C)                  # (WC, WC) f32

    def tile(v):   # per-channel (C,) -> lane-dense (1, W*C) with chan = lane % C
        return jnp.tile(v.astype(jnp.float32), W).reshape(1, WC)
    g1r, bt1r, g2r, bt2r = tile(g1), tile(bt1), tile(g2), tile(bt2)

    # VMEM budget: I/O (double-buffered), weights, padded scratch, and a
    # generous allowance for live f32 intermediates.
    act_bytes = N * H * WC * 4
    need = (4 * act_bytes
            + band1.size * 2 + band2.size * 2 + rep.size * 4 + 4 * WC * 4
            + N * (H + 2) * WC * 4
            + 8 * act_bytes
            + (4 << 20))
    vmem_limit = int(min(max(need, 32 << 20), 64 << 20))

    kernel = functools.partial(_basic_block_kernel, N=N, C=C, H=H, W=W)
    return pl.pallas_call(
        kernel,
        out_shape=jax.ShapeDtypeStruct((N * H, WC), jnp.float32),
        scratch_shapes=[pltpu.VMEM((N, H + 2, WC), jnp.float32)],
        compiler_params=pltpu.CompilerParams(vmem_limit_bytes=vmem_limit),
    )(x_packed, band1, band2, g1r, bt1r, g2r, bt2r, rep)


def basic_block(x_nchw, params):
    """PyTorch-convention NCHW wrapper around the packed lane-dense kernel."""
    N, C, H, W = x_nchw.shape
    x_packed = jnp.transpose(x_nchw, (0, 2, 3, 1)).reshape(N * H, W * C)
    out = basic_block_packed(x_packed, params, N=N, C=C, H=H, W=W)
    return out.reshape(N, H, W, C).transpose(0, 3, 1, 2)


def basic_block_reference(x_nchw, params):
    """Pure-JAX reference (mirrors the torch forward in train mode)."""
    w1, b1, g1, bt1, w2, b2, g2, bt2 = params

    def conv(x, w, b):
        y = lax.conv_general_dilated(
            x, w, window_strides=(1, 1), padding="SAME",
            dimension_numbers=("NCHW", "OIHW", "NCHW"))
        return y + b.reshape(1, -1, 1, 1)

    def bn(y, g, bt):
        mean = jnp.mean(y, axis=(0, 2, 3), keepdims=True)
        var = jnp.mean((y - mean) ** 2, axis=(0, 2, 3), keepdims=True)
        return ((y - mean) / jnp.sqrt(var + EPS)) * g.reshape(1, -1, 1, 1) \
            + bt.reshape(1, -1, 1, 1)

    h = jax.nn.relu(bn(conv(x_nchw, w1, b1), g1, bt1))
    h = bn(conv(h, w2, b2), g2, bt2)
    return jax.nn.relu(x_nchw + h)


if __name__ == "__main__":
    N, C, H, W = 2, 8, 16, 16            # W*C = 128 -> fully lane-dense packing
    key = jax.random.PRNGKey(0)
    ks = jax.random.split(key, 9)

    x = jax.random.normal(ks[0], (N, C, H, W), jnp.float32)
    w1 = jax.random.normal(ks[1], (C, C, 3, 3), jnp.float32) * 0.1
    b1 = jax.random.normal(ks[2], (C,), jnp.float32) * 0.1
    g1 = 1.0 + 0.1 * jax.random.normal(ks[3], (C,), jnp.float32)
    bt1 = 0.1 * jax.random.normal(ks[4], (C,), jnp.float32)
    w2 = jax.random.normal(ks[5], (C, C, 3, 3), jnp.float32) * 0.1
    b2 = jax.random.normal(ks[6], (C,), jnp.float32) * 0.1
    g2 = 1.0 + 0.1 * jax.random.normal(ks[7], (C,), jnp.float32)
    bt2 = 0.1 * jax.random.normal(ks[8], (C,), jnp.float32)
    params = (w1, b1, g1, bt1, w2, b2, g2, bt2)

    out = jax.block_until_ready(basic_block(x, params))
    ref = jax.block_until_ready(basic_block_reference(x, params))

    assert out.shape == (N, C, H, W)
    # tolerance sized for bf16 MXU operands (elementwise / BN math stays f32)
    assert jnp.allclose(out, ref, rtol=5e-2, atol=5e-2), \
        f"max abs diff = {jnp.max(jnp.abs(out - ref))}"
    print("KERNEL_OK")
</pallas_src>

<mosaic_0001>
module attributes {stable_mosaic.version = 11 : i64} {
  func.func @_basic_block_kernel(%arg0: memref<32x128xf32, #tpu.memory_space<vmem>>, %arg1: memref<3x128x128xbf16, #tpu.memory_space<vmem>>, %arg2: memref<3x128x128xbf16, #tpu.memory_space<vmem>>, %arg3: memref<1x128xf32, #tpu.memory_space<vmem>>, %arg4: memref<1x128xf32, #tpu.memory_space<vmem>>, %arg5: memref<1x128xf32, #tpu.memory_space<vmem>>, %arg6: memref<1x128xf32, #tpu.memory_space<vmem>>, %arg7: memref<128x128xf32, #tpu.memory_space<vmem>>, %arg8: memref<32x128xf32, #tpu.memory_space<vmem>>, %arg9: memref<2x18x128xf32, #tpu.memory_space<vmem>>) attributes {dimension_semantics = [], scalar_prefetch = 0 : i64, scratch_operands = 1 : i64, tpu.core_type = #tpu.core_type<tc>} {
    %cst = arith.constant 0.000000e+00 : f32
    %0 = vector.broadcast %cst : f32 to vector<2x1x128xf32>
    %c0 = arith.constant 0 : index
    %c0_0 = arith.constant 0 : index
    %c0_1 = arith.constant 0 : index
    %1 = vector.load %arg9[%c0, %c0_0, %c0_1] : memref<2x18x128xf32, #tpu.memory_space<vmem>>, vector<2x1x128xf32>
    tpu.vector_store %arg9[%c0, %c0_0, %c0_1], %0 {strides = array<i32>} : memref<2x18x128xf32, #tpu.memory_space<vmem>>, vector<2x1x128xf32>,
    %cst_2 = arith.constant 0.000000e+00 : f32
    %2 = vector.broadcast %cst_2 : f32 to vector<2x1x128xf32>
    %c0_3 = arith.constant 0 : index
    %c17 = arith.constant 17 : index
    %c0_4 = arith.constant 0 : index
    %3 = vector.load %arg9[%c0_3, %c17, %c0_4] : memref<2x18x128xf32, #tpu.memory_space<vmem>>, vector<2x1x128xf32>
    tpu.vector_store %arg9[%c0_3, %c17, %c0_4], %2 {strides = array<i32>} : memref<2x18x128xf32, #tpu.memory_space<vmem>>, vector<2x1x128xf32>,
    %c0_5 = arith.constant 0 : index
    %c0_6 = arith.constant 0 : index
    %4 = vector.load %arg0[%c0_5, %c0_6] : memref<32x128xf32, #tpu.memory_space<vmem>>, vector<32x128xf32>
    %5 = vector.shape_cast %4 : vector<32x128xf32> to vector<2x16x128xf32>
    %c0_7 = arith.constant 0 : index
    %c1 = arith.constant 1 : index
    %c0_8 = arith.constant 0 : index
    %6 = vector.load %arg9[%c0_7, %c1, %c0_8] : memref<2x18x128xf32, #tpu.memory_space<vmem>>, vector<2x16x128xf32>
    tpu.vector_store %arg9[%c0_7, %c1, %c0_8], %5 {strides = array<i32>} : memref<2x18x128xf32, #tpu.memory_space<vmem>>, vector<2x16x128xf32>,
    %c0_9 = arith.constant 0 : index
    %c0_10 = arith.constant 0 : index
    %c0_11 = arith.constant 0 : index
    %7 = vector.load %arg9[%c0_9, %c0_10, %c0_11] : memref<2x18x128xf32, #tpu.memory_space<vmem>>, vector<2x16x128xf32>
    %8 = vector.shape_cast %7 : vector<2x16x128xf32> to vector<32x128xf32>
    %9 = arith.truncf %8 : vector<32x128xf32> to vector<32x128xbf16>
    %c0_12 = arith.constant 0 : index
    %c0_13 = arith.constant 0 : index
    %c0_14 = arith.constant 0 : index
    %10 = vector.load %arg1[%c0_12, %c0_13, %c0_14] : memref<3x128x128xbf16, #tpu.memory_space<vmem>>, vector<1x128x128xbf16>
    %11 = vector.shape_cast %10 : vector<1x128x128xbf16> to vector<128x128xbf16>
    %cst_15 = arith.constant dense<0.000000e+00> : vector<32x128xf32>
    %12 = tpu.matmul %9, %11, %cst_15 {dimension_numbers = #tpu.dot_dimension_numbers<[1], [0], [0], [1], [0, 0, 1, 1], [], []>} : vector<32x128xbf16>, vector<128x128xbf16>, vector<32x128xf32> -> vector<32x128xf32>
    %c0_16 = arith.constant 0 : index
    %c1_17 = arith.constant 1 : index
    %c0_18 = arith.constant 0 : index
    %13 = vector.load %arg9[%c0_16, %c1_17, %c0_18] : memref<2x18x128xf32, #tpu.memory_space<vmem>>, vector<2x16x128xf32>
    %14 = vector.shape_cast %13 : vector<2x16x128xf32> to vector<32x128xf32>
    %15 = arith.truncf %14 : vector<32x128xf32> to vector<32x128xbf16>
    %c1_19 = arith.constant 1 : index
    %c0_20 = arith.constant 0 : index
    %c0_21 = arith.constant 0 : index
    %16 = vector.load %arg1[%c1_19, %c0_20, %c0_21] : memref<3x128x128xbf16, #tpu.memory_space<vmem>>, vector<1x128x128xbf16>
    %17 = vector.shape_cast %16 : vector<1x128x128xbf16> to vector<128x128xbf16>
    %cst_22 = arith.constant dense<0.000000e+00> : vector<32x128xf32>
    %18 = tpu.matmul %15, %17, %cst_22 {dimension_numbers = #tpu.dot_dimension_numbers<[1], [0], [0], [1], [0, 0, 1, 1], [], []>} : vector<32x128xbf16>, vector<128x128xbf16>, vector<32x128xf32> -> vector<32x128xf32>
    %19 = arith.addf %12, %18 : vector<32x128xf32>
    %c0_23 = arith.constant 0 : index
    %c2 = arith.constant 2 : index
    %c0_24 = arith.constant 0 : index
    %20 = vector.load %arg9[%c0_23, %c2, %c0_24] : memref<2x18x128xf32, #tpu.memory_space<vmem>>, vector<2x16x128xf32>
    %21 = vector.shape_cast %20 : vector<2x16x128xf32> to vector<32x128xf32>
    %22 = arith.truncf %21 : vector<32x128xf32> to vector<32x128xbf16>
    %c2_25 = arith.constant 2 : index
    %c0_26 = arith.constant 0 : index
    %c0_27 = arith.constant 0 : index
    %23 = vector.load %arg1[%c2_25, %c0_26, %c0_27] : memref<3x128x128xbf16, #tpu.memory_space<vmem>>, vector<1x128x128xbf16>
    %24 = vector.shape_cast %23 : vector<1x128x128xbf16> to vector<128x128xbf16>
    %cst_28 = arith.constant dense<0.000000e+00> : vector<32x128xf32>
    %25 = tpu.matmul %22, %24, %cst_28 {dimension_numbers = #tpu.dot_dimension_numbers<[1], [0], [0], [1], [0, 0, 1, 1], [], []>} : vector<32x128xbf16>, vector<128x128xbf16>, vector<32x128xf32> -> vector<32x128xf32>
    %26 = arith.addf %19, %25 : vector<32x128xf32>
    %c0_29 = arith.constant 0 : index
    %c0_30 = arith.constant 0 : index
    %27 = vector.load %arg3[%c0_29, %c0_30] : memref<1x128xf32, #tpu.memory_space<vmem>>, vector<1x128xf32>
    %c0_31 = arith.constant 0 : index
    %c0_32 = arith.constant 0 : index
    %28 = vector.load %arg4[%c0_31, %c0_32] : memref<1x128xf32, #tpu.memory_space<vmem>>, vector<1x128xf32>
    %cst_33 = arith.constant dense<0.000000e+00> : vector<128xf32>
    %29 = vector.multi_reduction <add>, %26, %cst_33 [0] : vector<32x128xf32> to vector<128xf32>
    %30 = vector.shape_cast %29 : vector<128xf32> to vector<1x128xf32>
    %31 = arith.mulf %26, %26 : vector<32x128xf32>
    %cst_34 = arith.constant dense<0.000000e+00> : vector<128xf32>
    %32 = vector.multi_reduction <add>, %31, %cst_34 [0] : vector<32x128xf32> to vector<128xf32>
    %33 = vector.shape_cast %32 : vector<128xf32> to vector<1x128xf32>
    %c0_35 = arith.constant 0 : index
    %c0_36 = arith.constant 0 : index
    %34 = vector.load %arg7[%c0_35, %c0_36] : memref<128x128xf32, #tpu.memory_space<vmem>>, vector<128x128xf32>
    %cst_37 = arith.constant dense<0.000000e+00> : vector<1x128xf32>
    %35 = tpu.matmul %30, %34, %cst_37 {dimension_numbers = #tpu.dot_dimension_numbers<[1], [0], [0], [1], [0, 0, 1, 1], [], []>} : vector<1x128xf32>, vector<128x128xf32>, vector<1x128xf32> -> vector<1x128xf32>
    %c0_38 = arith.constant 0 : index
    %c0_39 = arith.constant 0 : index
    %36 = vector.load %arg7[%c0_38, %c0_39] : memref<128x128xf32, #tpu.memory_space<vmem>>, vector<128x128xf32>
    %cst_40 = arith.constant dense<0.000000e+00> : vector<1x128xf32>
    %37 = tpu.matmul %33, %36, %cst_40 {dimension_numbers = #tpu.dot_dimension_numbers<[1], [0], [0], [1], [0, 0, 1, 1], [], []>} : vector<1x128xf32>, vector<128x128xf32>, vector<1x128xf32> -> vector<1x128xf32>
    %cst_41 = arith.constant 0.001953125 : f32
    %38 = vector.broadcast %cst_41 : f32 to vector<1x128xf32>
    %39 = arith.mulf %35, %38 : vector<1x128xf32>
    %cst_42 = arith.constant 0.001953125 : f32
    %40 = vector.broadcast %cst_42 : f32 to vector<1x128xf32>
    %41 = arith.mulf %37, %40 : vector<1x128xf32>
    %42 = arith.mulf %39, %39 : vector<1x128xf32>
    %43 = arith.subf %41, %42 : vector<1x128xf32>
    %cst_43 = arith.constant 9.99999974E-6 : f32
    %44 = vector.broadcast %cst_43 : f32 to vector<1x128xf32>
    %45 = arith.addf %43, %44 : vector<1x128xf32>
    %46 = math.rsqrt %45 : vector<1x128xf32>
    %47 = arith.mulf %27, %46 : vector<1x128xf32>
    %48 = arith.mulf %39, %47 : vector<1x128xf32>
    %49 = arith.subf %28, %48 : vector<1x128xf32>
    %50 = vector.broadcast %47 : vector<1x128xf32> to vector<32x128xf32>
    %51 = arith.mulf %26, %50 : vector<32x128xf32>
    %52 = vector.broadcast %49 : vector<1x128xf32> to vector<32x128xf32>
    %53 = arith.addf %51, %52 : vector<32x128xf32>
    %cst_44 = arith.constant 0.000000e+00 : f32
    %54 = vector.broadcast %cst_44 : f32 to vector<32x128xf32>
    %55 = arith.maximumf %53, %54 : vector<32x128xf32>
    %56 = vector.shape_cast %55 : vector<32x128xf32> to vector<2x16x128xf32>
    %c0_45 = arith.constant 0 : index
    %c1_46 = arith.constant 1 : index
    %c0_47 = arith.constant 0 : index
    %57 = vector.load %arg9[%c0_45, %c1_46, %c0_47] : memref<2x18x128xf32, #tpu.memory_space<vmem>>, vector<2x16x128xf32>
    tpu.vector_store %arg9[%c0_45, %c1_46, %c0_47], %56 {strides = array<i32>} : memref<2x18x128xf32, #tpu.memory_space<vmem>>, vector<2x16x128xf32>,
    %c0_48 = arith.constant 0 : index
    %c0_49 = arith.constant 0 : index
    %c0_50 = arith.constant 0 : index
    %58 = vector.load %arg9[%c0_48, %c0_49, %c0_50] : memref<2x18x128xf32, #tpu.memory_space<vmem>>, vector<2x16x128xf32>
    %59 = vector.shape_cast %58 : vector<2x16x128xf32> to vector<32x128xf32>
    %60 = arith.truncf %59 : vector<32x128xf32> to vector<32x128xbf16>
    %c0_51 = arith.constant 0 : index
    %c0_52 = arith.constant 0 : index
    %c0_53 = arith.constant 0 : index
    %61 = vector.load %arg2[%c0_51, %c0_52, %c0_53] : memref<3x128x128xbf16, #tpu.memory_space<vmem>>, vector<1x128x128xbf16>
    %62 = vector.shape_cast %61 : vector<1x128x128xbf16> to vector<128x128xbf16>
    %cst_54 = arith.constant dense<0.000000e+00> : vector<32x128xf32>
    %63 = tpu.matmul %60, %62, %cst_54 {dimension_numbers = #tpu.dot_dimension_numbers<[1], [0], [0], [1], [0, 0, 1, 1], [], []>} : vector<32x128xbf16>, vector<128x128xbf16>, vector<32x128xf32> -> vector<32x128xf32>
    %c0_55 = arith.constant 0 : index
    %c1_56 = arith.constant 1 : index
    %c0_57 = arith.constant 0 : index
    %64 = vector.load %arg9[%c0_55, %c1_56, %c0_57] : memref<2x18x128xf32, #tpu.memory_space<vmem>>, vector<2x16x128xf32>
    %65 = vector.shape_cast %64 : vector<2x16x128xf32> to vector<32x128xf32>
    %66 = arith.truncf %65 : vector<32x128xf32> to vector<32x128xbf16>
    %c1_58 = arith.constant 1 : index
    %c0_59 = arith.constant 0 : index
    %c0_60 = arith.constant 0 : index
    %67 = vector.load %arg2[%c1_58, %c0_59, %c0_60] : memref<3x128x128xbf16, #tpu.memory_space<vmem>>, vector<1x128x128xbf16>
    %68 = vector.shape_cast %67 : vector<1x128x128xbf16> to vector<128x128xbf16>
    %cst_61 = arith.constant dense<0.000000e+00> : vector<32x128xf32>
    %69 = tpu.matmul %66, %68, %cst_61 {dimension_numbers = #tpu.dot_dimension_numbers<[1], [0], [0], [1], [0, 0, 1, 1], [], []>} : vector<32x128xbf16>, vector<128x128xbf16>, vector<32x128xf32> -> vector<32x128xf32>
    %70 = arith.addf %63, %69 : vector<32x128xf32>
    %c0_62 = arith.constant 0 : index
    %c2_63 = arith.constant 2 : index
    %c0_64 = arith.constant 0 : index
    %71 = vector.load %arg9[%c0_62, %c2_63, %c0_64] : memref<2x18x128xf32, #tpu.memory_space<vmem>>, vector<2x16x128xf32>
    %72 = vector.shape_cast %71 : vector<2x16x128xf32> to vector<32x128xf32>
    %73 = arith.truncf %72 : vector<32x128xf32> to vector<32x128xbf16>
    %c2_65 = arith.constant 2 : index
    %c0_66 = arith.constant 0 : index
    %c0_67 = arith.constant 0 : index
    %74 = vector.load %arg2[%c2_65, %c0_66, %c0_67] : memref<3x128x128xbf16, #tpu.memory_space<vmem>>, vector<1x128x128xbf16>
    %75 = vector.shape_cast %74 : vector<1x128x128xbf16> to vector<128x128xbf16>
    %cst_68 = arith.constant dense<0.000000e+00> : vector<32x128xf32>
    %76 = tpu.matmul %73, %75, %cst_68 {dimension_numbers = #tpu.dot_dimension_numbers<[1], [0], [0], [1], [0, 0, 1, 1], [], []>} : vector<32x128xbf16>, vector<128x128xbf16>, vector<32x128xf32> -> vector<32x128xf32>
    %77 = arith.addf %70, %76 : vector<32x128xf32>
    %c0_69 = arith.constant 0 : index
    %c0_70 = arith.constant 0 : index
    %78 = vector.load %arg5[%c0_69, %c0_70] : memref<1x128xf32, #tpu.memory_space<vmem>>, vector<1x128xf32>
    %c0_71 = arith.constant 0 : index
    %c0_72 = arith.constant 0 : index
    %79 = vector.load %arg6[%c0_71, %c0_72] : memref<1x128xf32, #tpu.memory_space<vmem>>, vector<1x128xf32>
    %cst_73 = arith.constant dense<0.000000e+00> : vector<128xf32>
    %80 = vector.multi_reduction <add>, %77, %cst_73 [0] : vector<32x128xf32> to vector<128xf32>
    %81 = vector.shape_cast %80 : vector<128xf32> to vector<1x128xf32>
    %82 = arith.mulf %77, %77 : vector<32x128xf32>
    %cst_74 = arith.constant dense<0.000000e+00> : vector<128xf32>
    %83 = vector.multi_reduction <add>, %82, %cst_74 [0] : vector<32x128xf32> to vector<128xf32>
    %84 = vector.shape_cast %83 : vector<128xf32> to vector<1x128xf32>
    %c0_75 = arith.constant 0 : index
    %c0_76 = arith.constant 0 : index
    %85 = vector.load %arg7[%c0_75, %c0_76] : memref<128x128xf32, #tpu.memory_space<vmem>>, vector<128x128xf32>
    %cst_77 = arith.constant dense<0.000000e+00> : vector<1x128xf32>
    %86 = tpu.matmul %81, %85, %cst_77 {dimension_numbers = #tpu.dot_dimension_numbers<[1], [0], [0], [1], [0, 0, 1, 1], [], []>} : vector<1x128xf32>, vector<128x128xf32>, vector<1x128xf32> -> vector<1x128xf32>
    %c0_78 = arith.constant 0 : index
    %c0_79 = arith.constant 0 : index
    %87 = vector.load %arg7[%c0_78, %c0_79] : memref<128x128xf32, #tpu.memory_space<vmem>>, vector<128x128xf32>
    %cst_80 = arith.constant dense<0.000000e+00> : vector<1x128xf32>
    %88 = tpu.matmul %84, %87, %cst_80 {dimension_numbers = #tpu.dot_dimension_numbers<[1], [0], [0], [1], [0, 0, 1, 1], [], []>} : vector<1x128xf32>, vector<128x128xf32>, vector<1x128xf32> -> vector<1x128xf32>
    %cst_81 = arith.constant 0.001953125 : f32
    %89 = vector.broadcast %cst_81 : f32 to vector<1x128xf32>
    %90 = arith.mulf %86, %89 : vector<1x128xf32>
    %cst_82 = arith.constant 0.001953125 : f32
    %91 = vector.broadcast %cst_82 : f32 to vector<1x128xf32>
    %92 = arith.mulf %88, %91 : vector<1x128xf32>
    %93 = arith.mulf %90, %90 : vector<1x128xf32>
    %94 = arith.subf %92, %93 : vector<1x128xf32>
    %cst_83 = arith.constant 9.99999974E-6 : f32
    %95 = vector.broadcast %cst_83 : f32 to vector<1x128xf32>
    %96 = arith.addf %94, %95 : vector<1x128xf32>
    %97 = math.rsqrt %96 : vector<1x128xf32>
    %98 = arith.mulf %78, %97 : vector<1x128xf32>
    %99 = arith.mulf %90, %98 : vector<1x128xf32>
    %100 = arith.subf %79, %99 : vector<1x128xf32>
    %101 = vector.broadcast %98 : vector<1x128xf32> to vector<32x128xf32>
    %102 = arith.mulf %77, %101 : vector<32x128xf32>
    %103 = vector.broadcast %100 : vector<1x128xf32> to vector<32x128xf32>
    %104 = arith.addf %102, %103 : vector<32x128xf32>
    %105 = arith.addf %4, %104 : vector<32x128xf32>
    %cst_84 = arith.constant 0.000000e+00 : f32
    %106 = vector.broadcast %cst_84 : f32 to vector<32x128xf32>
    %107 = arith.maximumf %105, %106 : vector<32x128xf32>
    %c0_85 = arith.constant 0 : index
    %c0_86 = arith.constant 0 : index
    %108 = vector.load %arg8[%c0_85, %c0_86] : memref<32x128xf32, #tpu.memory_space<vmem>>, vector<32x128xf32>
    tpu.vector_store %arg8[%c0_85, %c0_86], %107 {strides = array<i32>} : memref<32x128xf32, #tpu.memory_space<vmem>>, vector<32x128xf32>,
    return
  }
}

</mosaic_0001>

<llo_original>
// kernel: tpu_custom_call.1
$region0: #{tpu_custom_call.1}
  #allocation0 [shape = 'u32[]', space=smem, size = 0x4, offset = 0x4, fixed_abs, tag = 'smem constant byte address 0x4 - core index']
  #allocation1 [shape = 'u32[144,128]{1,0:T(1,128)}', space=vmem, size = 0x12000, scoped, tag = 'internal scratch']
  #allocation2 [shape = 'f32[2,18,128]{2,1,0:T(8,128)}', space=vmem, size = 0x6000, scoped, tag = 'scratch operand']
  %s0 = inlined_call_operand.hbm [shape: f32[32,128], index: 0, kind: input, shape index: {}]
  %s1 = inlined_call_operand.hbm [shape: bf16[3,128,128], index: 1, kind: input, shape index: {}]
  %s2 = inlined_call_operand.hbm [shape: bf16[3,128,128], index: 2, kind: input, shape index: {}]
  %s3 = inlined_call_operand.vmem [shape: f32[1,128], index: 3, kind: input, shape index: {}]
  %s4 = inlined_call_operand.vmem [shape: f32[1,128], index: 4, kind: input, shape index: {}]
  %s5 = inlined_call_operand.vmem [shape: f32[1,128], index: 5, kind: input, shape index: {}]
  %s6 = inlined_call_operand.vmem [shape: f32[1,128], index: 6, kind: input, shape index: {}]
  %s7 = inlined_call_operand.hbm [shape: f32[128,128], index: 7, kind: input, shape index: {}]
  %s8 = inlined_call_operand.hbm [shape: f32[32,128], index: 8, kind: output, shape index: {}]
  %s9 = sld [smem:[#allocation0]]
  $region58: #{tpu_custom_call.1} parent=0
    _
  %s11 = ssub.s32 1, %s9
  %s12 = scalar_select 0, %s11, %s9
  $region1: #{tpu_custom_call.1} parent=0
    #allocation3 [shape = 'u8[16384]{0}', space=vmem, size = 0x4000, scoped, tag = 'input window, operand 0, single buffered']
    #allocation4 [shape = 's32[1]{0}', space=sflag, size = 0x4, scoped, tag = 'scoped memory for tpu_custom_call.1']
    #allocation5 [shape = 's32[1]{0}', space=sflag, size = 0x4, scoped, tag = 'scoped memory for tpu_custom_call.1']
    #allocation6 [shape = 'u8[98304]{0}', space=vmem, size = 0x18000, scoped, tag = 'input window, operand 1, single buffered']
    #allocation7 [shape = 's32[1]{0}', space=sflag, size = 0x4, scoped, tag = 'scoped memory for tpu_custom_call.1']
    #allocation8 [shape = 'u8[98304]{0}', space=vmem, size = 0x18000, scoped, tag = 'input window, operand 2, single buffered']
    #allocation9 [shape = 'u8[65536]{0}', space=vmem, size = 0x10000, scoped, tag = 'input window, operand 7, single buffered']
    #allocation10 [shape = 's32[1]{0}', space=sflag, size = 0x4, scoped, tag = 'scoped memory for tpu_custom_call.1']
    #allocation11 [shape = 'u8[16384]{0}', space=vmem, size = 0x4000, scoped, tag = 'output window, operand 0, single buffered']
    %13 = vsyncpa [#allocation4], 0
    %14 = vsyncpa [#allocation7], 0
    %15 = vsyncpa [#allocation10], 0
    %16 = vsyncpa [#allocation5], 0
    // Predicated region
    $region2: #{tpu_custom_call.1} parent=1 // pred_check
      _
    $region3: #{tpu_custom_call.1} parent=1 // pred_check_branch
      %18 = sbr.rel (0) target = $region5
    $region4: #{tpu_custom_call.1} parent=1 // pred_region
      %s20 = ssub.s32 512, 512
      %21 = vsyncadd [#allocation4], %s20
      %s22 = sshll.u32 [#allocation3], 4
      %s23 = int_to_ptr.vmem [resolvable:$true] %s22
      %28 = dma.hbm_to_vmem [thread:$0]  %s0, 512, %s23, [#allocation4], 128, 128, 8
    $region5: #{tpu_custom_call.1} parent=1 // pred_fallthru
      _
    // Predicated region
    $region6: #{tpu_custom_call.1} parent=1 // pred_check
      _
    $region7: #{tpu_custom_call.1} parent=1 // pred_check_branch
      %30 = sbr.rel (0) target = $region9
    $region8: #{tpu_custom_call.1} parent=1 // pred_region
      %s32 = ssub.s32 3072, 3072
      %33 = vsyncadd [#allocation7], %s32
      %s34 = sshll.u32 [#allocation6], 4
      %s35 = int_to_ptr.vmem [resolvable:$true] %s34
      %40 = dma.hbm_to_vmem [thread:$0]  %s1, 3072, %s35, [#allocation7], 64, 64, 4
    $region9: #{tpu_custom_call.1} parent=1 // pred_fallthru
      _
    // Predicated region
    $region10: #{tpu_custom_call.1} parent=1 // pred_check
      _
    $region11: #{tpu_custom_call.1} parent=1 // pred_check_branch
      %42 = sbr.rel (0) target = $region13
    $region12: #{tpu_custom_call.1} parent=1 // pred_region
      %s44 = ssub.s32 3072, 3072
      %45 = vsyncadd [#allocation7], %s44
      %s46 = sshll.u32 [#allocation8], 4
      %s47 = int_to_ptr.vmem [resolvable:$true] %s46
      %52 = dma.hbm_to_vmem [thread:$0]  %s2, 3072, %s47, [#allocation7], 64, 64, 4
    $region13: #{tpu_custom_call.1} parent=1 // pred_fallthru
      _
    // Predicated region
    $region14: #{tpu_custom_call.1} parent=1 // pred_check
      _
    $region15: #{tpu_custom_call.1} parent=1 // pred_check_branch
      %54 = sbr.rel (0) target = $region17
    $region16: #{tpu_custom_call.1} parent=1 // pred_region
      _
    $region17: #{tpu_custom_call.1} parent=1 // pred_fallthru
      _
    // Predicated region
    $region18: #{tpu_custom_call.1} parent=1 // pred_check
      _
    $region19: #{tpu_custom_call.1} parent=1 // pred_check_branch
      %56 = sbr.rel (0) target = $region21
    $region20: #{tpu_custom_call.1} parent=1 // pred_region
      _
    $region21: #{tpu_custom_call.1} parent=1 // pred_fallthru
      _
    // Predicated region
    $region22: #{tpu_custom_call.1} parent=1 // pred_check
      _
    $region23: #{tpu_custom_call.1} parent=1 // pred_check_branch
      %58 = sbr.rel (0) target = $region25
    $region24: #{tpu_custom_call.1} parent=1 // pred_region
      _
    $region25: #{tpu_custom_call.1} parent=1 // pred_fallthru
      _
    // Predicated region
    $region26: #{tpu_custom_call.1} parent=1 // pred_check
      _
    $region27: #{tpu_custom_call.1} parent=1 // pred_check_branch
      %60 = sbr.rel (0) target = $region29
    $region28: #{tpu_custom_call.1} parent=1 // pred_region
      _
    $region29: #{tpu_custom_call.1} parent=1 // pred_fallthru
      _
    // Predicated region
    $region30: #{tpu_custom_call.1} parent=1 // pred_check
      _
    $region31: #{tpu_custom_call.1} parent=1 // pred_check_branch
      %62 = sbr.rel (0) target = $region33
    $region32: #{tpu_custom_call.1} parent=1 // pred_region
      %s64 = ssub.s32 2048, 2048
      %65 = vsyncadd [#allocation10], %s64
      %s66 = sshll.u32 [#allocation9], 4
      %s67 = int_to_ptr.vmem [resolvable:$true] %s66
      %72 = dma.hbm_to_vmem [thread:$0]  %s7, 2048, %s67, [#allocation10], 128, 128, 8
    $region33: #{tpu_custom_call.1} parent=1 // pred_fallthru
      _
    // Predicated region
    $region34: #{tpu_custom_call.1} parent=1 // pred_check
      _
    $region35: #{tpu_custom_call.1} parent=1 // pred_check_branch
      %74 = sbr.rel (0) target = $region37
    $region36: #{tpu_custom_call.1} parent=1 // pred_region
      %75 = dma.done [#allocation4], 512
    $region37: #{tpu_custom_call.1} parent=1 // pred_fallthru
      _
    // Predicated region
    $region38: #{tpu_custom_call.1} parent=1 // pred_check
      _
    $region39: #{tpu_custom_call.1} parent=1 // pred_check_branch
      %77 = sbr.rel (0) target = $region41
    $region40: #{tpu_custom_call.1} parent=1 // pred_region
      %78 = dma.done [#allocation7], 3072
    $region41: #{tpu_custom_call.1} parent=1 // pred_fallthru
      _
    // Predicated region
    $region42: #{tpu_custom_call.1} parent=1 // pred_check
      _
    $region43: #{tpu_custom_call.1} parent=1 // pred_check_branch
      %80 = sbr.rel (0) target = $region45
    $region44: #{tpu_custom_call.1} parent=1 // pred_region
      %81 = dma.done [#allocation7], 3072
    $region45: #{tpu_custom_call.1} parent=1 // pred_fallthru
      _
    // Predicated region
    $region46: #{tpu_custom_call.1} parent=1 // pred_check
      _
    $region47: #{tpu_custom_call.1} parent=1 // pred_check_branch
      %83 = sbr.rel (0) target = $region49
    $region48: #{tpu_custom_call.1} parent=1 // pred_region
      %84 = dma.done [#allocation10], 2048
    $region49: #{tpu_custom_call.1} parent=1 // pred_fallthru
      _
    %86 = vst [vmem:[#allocation2] sm:$0x1] 0.0
    %87 = vst [vmem:[#allocation2 + $0x18] sm:$0x1] 0.0
    %88 = vst [vmem:[#allocation2 + $0x11] sm:$0x1] 0.0
    %89 = vst [vmem:[#allocation2 + $0x29] sm:$0x1] 0.0
    %v90 = vld [vmem:[#allocation3] sm:$0xff]
    %v91 = vld [vmem:[#allocation3 + $0x8] sm:$0xff]
    %v92 = vld [vmem:[#allocation3 + $0x10] sm:$0xff]
    %v93 = vld [vmem:[#allocation3 + $0x18] sm:$0xff]
    %94 = vst [vmem:[#allocation2 + $0x1] sm:$0xff] %v90
    %95 = vst [vmem:[#allocation2 + $0x9] sm:$0xff] %v91
    %96 = vst [vmem:[#allocation2 + $0x19] sm:$0xff] %v92
    %97 = vst [vmem:[#allocation2 + $0x21] sm:$0xff] %v93
    %v98 = vld [vmem:[#allocation2] sm:$0xff]
    %v99 = vld [vmem:[#allocation2 + $0x8] sm:$0xff]
    %v100 = vld [vmem:[#allocation2 + $0x18] sm:$0xff]
    %v101 = vld [vmem:[#allocation2 + $0x20] sm:$0xff]
    %v102 = vpack.c.bf16 %v99, %v98
    %v103 = vpack.c.bf16 %v101, %v100
    %v104 = vld [vmem:[#allocation6] sm:$0xf]
    %v105 = vld [vmem:[#allocation6 + $0x4] sm:$0xf]
    %v106 = vld [vmem:[#allocation6 + $0x8] sm:$0xf]
    %v107 = vld [vmem:[#allocation6 + $0xc] sm:$0xf]
    %v108 = vld [vmem:[#allocation6 + $0x10] sm:$0xf]
    %v109 = vld [vmem:[#allocation6 + $0x14] sm:$0xf]
    %v110 = vld [vmem:[#allocation6 + $0x18] sm:$0xf]
    %v111 = vld [vmem:[#allocation6 + $0x1c] sm:$0xf]
    %v112 = vld [vmem:[#allocation6 + $0x20] sm:$0xf]
    %v113 = vld [vmem:[#allocation6 + $0x24] sm:$0xf]
    %v114 = vld [vmem:[#allocation6 + $0x28] sm:$0xf]
    %v115 = vld [vmem:[#allocation6 + $0x2c] sm:$0xf]
    %v116 = vld [vmem:[#allocation6 + $0x30] sm:$0xf]
    %v117 = vld [vmem:[#allocation6 + $0x34] sm:$0xf]
    %v118 = vld [vmem:[#allocation6 + $0x38] sm:$0xf]
    %v119 = vld [vmem:[#allocation6 + $0x3c] sm:$0xf]
    %v120 = vld [vmem:[#allocation2 + $0x1] sm:$0xff]
    %v121 = vld [vmem:[#allocation2 + $0x9] sm:$0xff]
    %v122 = vld [vmem:[#allocation2 + $0x19] sm:$0xff]
    %v123 = vld [vmem:[#allocation2 + $0x21] sm:$0xff]
    %v124 = vpack.c.bf16 %v121, %v120
    %v125 = vpack.c.bf16 %v123, %v122
    %s126 = scalar_lea.vmem [#allocation6], 64
    %v127 = vld [vmem:[%s126] sm:$0xf]
    %v128 = vld [vmem:[%s126 + $0x4] sm:$0xf]
    %v129 = vld [vmem:[%s126 + $0x8] sm:$0xf]
    %v130 = vld [vmem:[%s126 + $0xc] sm:$0xf]
    %v131 = vld [vmem:[%s126 + $0x10] sm:$0xf]
    %v132 = vld [vmem:[%s126 + $0x14] sm:$0xf]
    %v133 = vld [vmem:[%s126 + $0x18] sm:$0xf]
    %v134 = vld [vmem:[%s126 + $0x1c] sm:$0xf]
    %v135 = vld [vmem:[%s126 + $0x20] sm:$0xf]
    %v136 = vld [vmem:[%s126 + $0x24] sm:$0xf]
    %v137 = vld [vmem:[%s126 + $0x28] sm:$0xf]
    %v138 = vld [vmem:[%s126 + $0x2c] sm:$0xf]
    %v139 = vld [vmem:[%s126 + $0x30] sm:$0xf]
    %v140 = vld [vmem:[%s126 + $0x34] sm:$0xf]
    %v141 = vld [vmem:[%s126 + $0x38] sm:$0xf]
    %v142 = vld [vmem:[%s126 + $0x3c] sm:$0xf]
    %v159 = vunpack.c.l.b16 %v127
    %v160 = vunpack.c.l.b16 %v128
    %v161 = vunpack.c.l.b16 %v129
    %v162 = vunpack.c.l.b16 %v130
    %v163 = vunpack.c.l.b16 %v131
    %v164 = vunpack.c.l.b16 %v132
    %v165 = vunpack.c.l.b16 %v133
    %v166 = vunpack.c.l.b16 %v134
    %v167 = vunpack.c.l.b16 %v135
    %v168 = vunpack.c.l.b16 %v136
    %v169 = vunpack.c.l.b16 %v137
    %v170 = vunpack.c.l.b16 %v138
    %v171 = vunpack.c.l.b16 %v139
    %v172 = vunpack.c.l.b16 %v140
    %v173 = vunpack.c.l.b16 %v141
    %v174 = vunpack.c.l.b16 %v142
    %v175 = vpack.c.b16 %v160, %v159
    %v176 = vpack.c.b16 %v162, %v161
    %v177 = vpack.c.b16 %v164, %v163
    %v178 = vpack.c.b16 %v166, %v165
    %v179 = vpack.c.b16 %v168, %v167
    %v180 = vpack.c.b16 %v170, %v169
    %v181 = vpack.c.b16 %v172, %v171
    %v182 = vpack.c.b16 %v174, %v173
    %191 = vmatprep.subr.bf16.mxu0 0
    %192 = vmatpush1.bf16.msra.mxu0 %v175
    %193 = vmatprep.subr.bf16.mxu0 0
    %194 = vmatpush1.bf16.msra.mxu0 %v176
    %195 = vmatprep.subr.bf16.mxu0 0
    %196 = vmatpush1.bf16.msra.mxu0 %v177
    %197 = vmatprep.subr.bf16.mxu0 0
    %198 = vmatpush1.bf16.msra.mxu0 %v178
    %199 = vmatprep.subr.bf16.mxu0 0
    %200 = vmatpush1.bf16.msra.mxu0 %v179
    %201 = vmatprep.subr.bf16.mxu0 0
    %202 = vmatpush1.bf16.msra.mxu0 %v180
    %203 = vmatprep.subr.bf16.mxu0 0
    %204 = vmatpush1.bf16.msra.mxu0 %v181
    %205 = vmatprep.subr.bf16.mxu0 0
    %206 = vmatpush1.bf16.msra.mxu0 %v182
    %207 = vmatprep.subr.bf16.mxu0 0
    %208 = vmatpush1.bf16.msra.mxu0 0
    %209 = vmatprep.subr.bf16.mxu0 0
    %210 = vmatpush1.bf16.msra.mxu0 0
    %211 = vmatprep.subr.bf16.mxu0 0
    %212 = vmatpush1.bf16.msra.mxu0 0
    %213 = vmatprep.subr.bf16.mxu0 0
    %214 = vmatpush1.bf16.msra.mxu0 0
    %215 = vmatprep.subr.bf16.mxu0 0
    %216 = vmatpush1.bf16.msra.mxu0 0
    %217 = vmatprep.subr.bf16.mxu0 0
    %218 = vmatpush1.bf16.msra.mxu0 0
    %219 = vmatprep.subr.bf16.mxu0 0
    %220 = vmatpush1.bf16.msra.mxu0 0
    %221 = vmatprep.subr.bf16.mxu0 0
    %222 = vmatpush1.bf16.msra.mxu0 0
    %223 = vmatprep.mubr.bf16.mxu0 0
    %224 = vmatmul.mubr.bf16.gmra.mrb[0].mxu0 %v124
    %v225 = vpop.f32.mrb[0].mxu0
    %v226 = vadd.f32 0.0, %v225
    %v227 = vpop.f32.mrb[0].mxu0
    %v228 = vpop.f32.mrb[0].mxu0
    %v229 = vadd.f32 0.0, %v228
    %v230 = vpop.f32.mrb[0].mxu0
    %231 = vmatprep.mubr.bf16.mxu0 0
    %232 = vmatmul.mubr.bf16.gmra.mrb[0].mxu0 %v125
    %v233 = vpop.f32.mrb[0].mxu0
    %v234 = vadd.f32 0.0, %v233
    %v235 = vpop.f32.mrb[0].mxu0
    %v236 = vpop.f32.mrb[0].mxu0
    %v237 = vadd.f32 0.0, %v236
    %v238 = vpop.f32.mrb[0].mxu0
    %239 = vdwg.mxu0
    %v256 = vunpack.c.l.b16 %v104
    %v257 = vunpack.c.l.b16 %v105
    %v258 = vunpack.c.l.b16 %v106
    %v259 = vunpack.c.l.b16 %v107
    %v260 = vunpack.c.l.b16 %v108
    %v261 = vunpack.c.l.b16 %v109
    %v262 = vunpack.c.l.b16 %v110
    %v263 = vunpack.c.l.b16 %v111
    %v264 = vunpack.c.l.b16 %v112
    %v265 = vunpack.c.l.b16 %v113
    %v266 = vunpack.c.l.b16 %v114
    %v267 = vunpack.c.l.b16 %v115
    %v268 = vunpack.c.l.b16 %v116
    %v269 = vunpack.c.l.b16 %v117
    %v270 = vunpack.c.l.b16 %v118
    %v271 = vunpack.c.l.b16 %v119
    %v272 = vpack.c.b16 %v257, %v256
    %v273 = vpack.c.b16 %v259, %v258
    %v274 = vpack.c.b16 %v261, %v260
    %v275 = vpack.c.b16 %v263, %v262
    %v276 = vpack.c.b16 %v265, %v264
    %v277 = vpack.c.b16 %v267, %v266
    %v278 = vpack.c.b16 %v269, %v268
    %v279 = vpack.c.b16 %v271, %v270
    %288 = vmatprep.subr.bf16.mxu0 0
    %289 = vmatpush1.bf16.msra.mxu0 %v272
    %290 = vmatprep.subr.bf16.mxu0 0
    %291 = vmatpush1.bf16.msra.mxu0 %v273
    %292 = vmatprep.subr.bf16.mxu0 0
    %293 = vmatpush1.bf16.msra.mxu0 %v274
    %294 = vmatprep.subr.bf16.mxu0 0
    %295 = vmatpush1.bf16.msra.mxu0 %v275
    %296 = vmatprep.subr.bf16.mxu0 0
    %297 = vmatpush1.bf16.msra.mxu0 %v276
    %298 = vmatprep.subr.bf16.mxu0 0
    %299 = vmatpush1.bf16.msra.mxu0 %v277
    %300 = vmatprep.subr.bf16.mxu0 0
    %301 = vmatpush1.bf16.msra.mxu0 %v278
    %302 = vmatprep.subr.bf16.mxu0 0
    %303 = vmatpush1.bf16.msra.mxu0 %v279
    %304 = vmatprep.subr.bf16.mxu0 0
    %305 = vmatpush1.bf16.msra.mxu0 0
    %306 = vmatprep.subr.bf16.mxu0 0
    %307 = vmatpush1.bf16.msra.mxu0 0
    %308 = vmatprep.subr.bf16.mxu0 0
    %309 = vmatpush1.bf16.msra.mxu0 0
    %310 = vmatprep.subr.bf16.mxu0 0
    %311 = vmatpush1.bf16.msra.mxu0 0
    %312 = vmatprep.subr.bf16.mxu0 0
    %313 = vmatpush1.bf16.msra.mxu0 0
    %314 = vmatprep.subr.bf16.mxu0 0
    %315 = vmatpush1.bf16.msra.mxu0 0
    %316 = vmatprep.subr.bf16.mxu0 0
    %317 = vmatpush1.bf16.msra.mxu0 0
    %318 = vmatprep.subr.bf16.mxu0 0
    %319 = vmatpush1.bf16.msra.mxu0 0
    %320 = vmatprep.mubr.bf16.mxu0 0
    %321 = vmatmul.mubr.bf16.gmra.mrb[0].mxu0 %v102
    %v322 = vpop.f32.mrb[0].mxu0
    %v323 = vadd.f32 %v226, %v322
    %v324 = vpop.f32.mrb[0].mxu0
    %v325 = vpop.f32.mrb[0].mxu0
    %v326 = vadd.f32 %v229, %v325
    %v327 = vpop.f32.mrb[0].mxu0
    %328 = vmatprep.mubr.bf16.mxu0 0
    %329 = vmatmul.mubr.bf16.gmra.mrb[0].mxu0 %v103
    %v330 = vpop.f32.mrb[0].mxu0
    %v331 = vadd.f32 %v234, %v330
    %v332 = vpop.f32.mrb[0].mxu0
    %v333 = vpop.f32.mrb[0].mxu0
    %v334 = vadd.f32 %v237, %v333
    %v335 = vpop.f32.mrb[0].mxu0
    %336 = vdwg.mxu0
    %v337 = vld [vmem:[#allocation2 + $0x2] sm:$0xff]
    %v338 = vld [vmem:[#allocation2 + $0xa] sm:$0xff]
    %v339 = vld [vmem:[#allocation2 + $0x1a] sm:$0xff]
    %v340 = vld [vmem:[#allocation2 + $0x22] sm:$0xff]
    %v341 = vpack.c.bf16 %v338, %v337
    %v342 = vpack.c.bf16 %v340, %v339
    %s343 = scalar_lea.vmem [#allocation6], 128
    %v344 = vld [vmem:[%s343] sm:$0xf]
    %v345 = vld [vmem:[%s343 + $0x4] sm:$0xf]
    %v346 = vld [vmem:[%s343 + $0x8] sm:$0xf]
    %v347 = vld [vmem:[%s343 + $0xc] sm:$0xf]
    %v348 = vld [vmem:[%s343 + $0x10] sm:$0xf]
    %v349 = vld [vmem:[%s343 + $0x14] sm:$0xf]
    %v350 = vld [vmem:[%s343 + $0x18] sm:$0xf]
    %v351 = vld [vmem:[%s343 + $0x1c] sm:$0xf]
    %v352 = vld [vmem:[%s343 + $0x20] sm:$0xf]
    %v353 = vld [vmem:[%s343 + $0x24] sm:$0xf]
    %v354 = vld [vmem:[%s343 + $0x28] sm:$0xf]
    %v355 = vld [vmem:[%s343 + $0x2c] sm:$0xf]
    %v356 = vld [vmem:[%s343 + $0x30] sm:$0xf]
    %v357 = vld [vmem:[%s343 + $0x34] sm:$0xf]
    %v358 = vld [vmem:[%s343 + $0x38] sm:$0xf]
    %v359 = vld [vmem:[%s343 + $0x3c] sm:$0xf]
    %v376 = vunpack.c.l.b16 %v344
    %v377 = vunpack.c.l.b16 %v345
    %v378 = vunpack.c.l.b16 %v346
    %v379 = vunpack.c.l.b16 %v347
    %v380 = vunpack.c.l.b16 %v348
    %v381 = vunpack.c.l.b16 %v349
    %v382 = vunpack.c.l.b16 %v350
    %v383 = vunpack.c.l.b16 %v351
    %v384 = vunpack.c.l.b16 %v352
    %v385 = vunpack.c.l.b16 %v353
    %v386 = vunpack.c.l.b16 %v354
    %v387 = vunpack.c.l.b16 %v355
    %v388 = vunpack.c.l.b16 %v356
    %v389 = vunpack.c.l.b16 %v357
    %v390 = vunpack.c.l.b16 %v358
    %v391 = vunpack.c.l.b16 %v359
    %v392 = vpack.c.b16 %v377, %v376
    %v393 = vpack.c.b16 %v379, %v378
    %v394 = vpack.c.b16 %v381, %v380
    %v395 = vpack.c.b16 %v383, %v382
    %v396 = vpack.c.b16 %v385, %v384
    %v397 = vpack.c.b16 %v387, %v386
    %v398 = vpack.c.b16 %v389, %v388
    %v399 = vpack.c.b16 %v391, %v390
    %408 = vmatprep.subr.bf16.mxu0 0
    %409 = vmatpush1.bf16.msra.mxu0 %v392
    %410 = vmatprep.subr.bf16.mxu0 0
    %411 = vmatpush1.bf16.msra.mxu0 %v393
    %412 = vmatprep.subr.bf16.mxu0 0
    %413 = vmatpush1.bf16.msra.mxu0 %v394
    %414 = vmatprep.subr.bf16.mxu0 0
    %415 = vmatpush1.bf16.msra.mxu0 %v395
    %416 = vmatprep.subr.bf16.mxu0 0
    %417 = vmatpush1.bf16.msra.mxu0 %v396
    %418 = vmatprep.subr.bf16.mxu0 0
    %419 = vmatpush1.bf16.msra.mxu0 %v397
    %420 = vmatprep.subr.bf16.mxu0 0
    %421 = vmatpush1.bf16.msra.mxu0 %v398
    %422 = vmatprep.subr.bf16.mxu0 0
    %423 = vmatpush1.bf16.msra.mxu0 %v399
    %424 = vmatprep.subr.bf16.mxu0 0
    %425 = vmatpush1.bf16.msra.mxu0 0
    %426 = vmatprep.subr.bf16.mxu0 0
    %427 = vmatpush1.bf16.msra.mxu0 0
    %428 = vmatprep.subr.bf16.mxu0 0
    %429 = vmatpush1.bf16.msra.mxu0 0
    %430 = vmatprep.subr.bf16.mxu0 0
    %431 = vmatpush1.bf16.msra.mxu0 0
    %432 = vmatprep.subr.bf16.mxu0 0
    %433 = vmatpush1.bf16.msra.mxu0 0
    %434 = vmatprep.subr.bf16.mxu0 0
    %435 = vmatpush1.bf16.msra.mxu0 0
    %436 = vmatprep.subr.bf16.mxu0 0
    %437 = vmatpush1.bf16.msra.mxu0 0
    %438 = vmatprep.subr.bf16.mxu0 0
    %439 = vmatpush1.bf16.msra.mxu0 0
    %440 = vmatprep.mubr.bf16.mxu0 0
    %441 = vmatmul.mubr.bf16.gmra.mrb[0].mxu0 %v341
    %v442 = vpop.f32.mrb[0].mxu0
    %v443 = vadd.f32 0.0, %v442
    %v444 = vpop.f32.mrb[0].mxu0
    %v445 = vpop.f32.mrb[0].mxu0
    %v446 = vadd.f32 0.0, %v445
    %v447 = vpop.f32.mrb[0].mxu0
    %448 = vmatprep.mubr.bf16.mxu0 0
    %449 = vmatmul.mubr.bf16.gmra.mrb[0].mxu0 %v342
    %v450 = vpop.f32.mrb[0].mxu0
    %v451 = vadd.f32 0.0, %v450
    %v452 = vpop.f32.mrb[0].mxu0
    %v453 = vpop.f32.mrb[0].mxu0
    %v454 = vadd.f32 0.0, %v453
    %v455 = vpop.f32.mrb[0].mxu0
    %456 = vdwg.mxu0
    %v457 = vadd.f32 %v323, %v443
    %v458 = vadd.f32 %v326, %v446
    %v459 = vadd.f32 %v331, %v451
    %v460 = vadd.f32 %v334, %v454
    %v461 = vld [vmem:[%s3] sm:$0x1]
    %v462 = vld [vmem:[%s4] sm:$0x1]
    %v463 = vadd.f32 %v457, %v458
    %v464 = vadd.f32 %v463, %v459
    %v465 = vadd.f32 %v464, %v460
    %v466 = vrot.slane %v465, 4
    %v467 = vadd.f32 %v465, %v466
    %v468 = vrot.slane %v467, 2
    %v469 = vadd.f32 %v467, %v468
    %v470 = vrot.slane %v469, 1
    %v471 = vadd.f32 %v469, %v470
    %v472 = vmul.f32 %v457, %v457
    %v473 = vmul.f32 %v458, %v458
    %v474 = vmul.f32 %v459, %v459
    %v475 = vmul.f32 %v460, %v460
    %v476 = vadd.f32 %v472, %v473
    %v477 = vadd.f32 %v476, %v474
    %v478 = vadd.f32 %v477, %v475
    %v479 = vrot.slane %v478, 4
    %v480 = vadd.f32 %v478, %v479
    %v481 = vrot.slane %v480, 2
    %v482 = vadd.f32 %v480, %v481
    %v483 = vrot.slane %v482, 1
    %v484 = vadd.f32 %v482, %v483
    %v485 = vld [vmem:[#allocation9] sm:$0xff]
    %v486 = vld [vmem:[#allocation9 + $0x8] sm:$0xff]
    %v487 = vld [vmem:[#allocation9 + $0x10] sm:$0xff]
    %v488 = vld [vmem:[#allocation9 + $0x18] sm:$0xff]
    %v489 = vld [vmem:[#allocation9 + $0x20] sm:$0xff]
    %v490 = vld [vmem:[#allocation9 + $0x28] sm:$0xff]
    %v491 = vld [vmem:[#allocation9 + $0x30] sm:$0xff]
    %v492 = vld [vmem:[#allocation9 + $0x38] sm:$0xff]
    %v493 = vld [vmem:[#allocation9 + $0x40] sm:$0xff]
    %v494 = vld [vmem:[#allocation9 + $0x48] sm:$0xff]
    %v495 = vld [vmem:[#allocation9 + $0x50] sm:$0xff]
    %v496 = vld [vmem:[#allocation9 + $0x58] sm:$0xff]
    %v497 = vld [vmem:[#allocation9 + $0x60] sm:$0xff]
    %v498 = vld [vmem:[#allocation9 + $0x68] sm:$0xff]
    %v499 = vld [vmem:[#allocation9 + $0x70] sm:$0xff]
    %v500 = vld [vmem:[#allocation9 + $0x78] sm:$0xff]
    %501 = vmatprep.subr.mxu0 0.0
    %502 = vmatpush1.msra.mxu0 %v485
    %503 = vmatprep.subr.mxu0 0.0
    %504 = vmatpush1.msra.mxu0 %v486
    %505 = vmatprep.subr.mxu0 0.0
    %506 = vmatpush1.msra.mxu0 %v487
    %507 = vmatprep.subr.mxu0 0.0
    %508 = vmatpush1.msra.mxu0 %v488
    %509 = vmatprep.subr.mxu0 0.0
    %510 = vmatpush1.msra.mxu0 %v489
    %511 = vmatprep.subr.mxu0 0.0
    %512 = vmatpush1.msra.mxu0 %v490
    %513 = vmatprep.subr.mxu0 0.0
    %514 = vmatpush1.msra.mxu0 %v491
    %515 = vmatprep.subr.mxu0 0.0
    %516 = vmatpush1.msra.mxu0 %v492
    %517 = vmatprep.subr.mxu0 0.0
    %518 = vmatpush1.msra.mxu0 %v493
    %519 = vmatprep.subr.mxu0 0.0
    %520 = vmatpush1.msra.mxu0 %v494
    %521 = vmatprep.subr.mxu0 0.0
    %522 = vmatpush1.msra.mxu0 %v495
    %523 = vmatprep.subr.mxu0 0.0
    %524 = vmatpush1.msra.mxu0 %v496
    %525 = vmatprep.subr.mxu0 0.0
    %526 = vmatpush1.msra.mxu0 %v497
    %527 = vmatprep.subr.mxu0 0.0
    %528 = vmatpush1.msra.mxu0 %v498
    %529 = vmatprep.subr.mxu0 0.0
    %530 = vmatpush1.msra.mxu0 %v499
    %531 = vmatprep.subr.mxu0 0.0
    %532 = vmatpush1.msra.mxu0 %v500
    %533 = vmatprep.subr.mxu0 0.0
    %534 = vmatpush1.msra.mxu0 0.0
    %535 = vmatprep.subr.mxu0 0.0
    %536 = vmatpush1.msra.mxu0 0.0
    %537 = vmatprep.subr.mxu0 0.0
    %538 = vmatpush1.msra.mxu0 0.0
    %539 = vmatprep.subr.mxu0 0.0
    %540 = vmatpush1.msra.mxu0 0.0
    %541 = vmatprep.subr.mxu0 0.0
    %542 = vmatpush1.msra.mxu0 0.0
    %543 = vmatprep.subr.mxu0 0.0
    %544 = vmatpush1.msra.mxu0 0.0
    %545 = vmatprep.subr.mxu0 0.0
    %546 = vmatpush1.msra.mxu0 0.0
    %547 = vmatprep.subr.mxu0 0.0
    %548 = vmatpush1.msra.mxu0 0.0
    %549 = vmatprep.subr.mxu0 0.0
    %550 = vmatpush1.msra.mxu0 0.0
    %551 = vmatprep.subr.mxu0 0.0
    %552 = vmatpush1.msra.mxu0 0.0
    %553 = vmatprep.subr.mxu0 0.0
    %554 = vmatpush1.msra.mxu0 0.0
    %555 = vmatprep.subr.mxu0 0.0
    %556 = vmatpush1.msra.mxu0 0.0
    %557 = vmatprep.subr.mxu0 0.0
    %558 = vmatpush1.msra.mxu0 0.0
    %559 = vmatprep.subr.mxu0 0.0
    %560 = vmatpush1.msra.mxu0 0.0
    %561 = vmatprep.subr.mxu0 0.0
    %562 = vmatpush1.msra.mxu0 0.0
    %563 = vmatprep.subr.mxu0 0.0
    %564 = vmatpush1.msra.mxu0 0.0
    %565 = vmatprep.mubr.f32.mxu0 0.0
    %566 = vmatmul.mubr.f32.gmra.mrb[0].mxu0 %v471
    %v567 = vpop.f32.mrb[0].mxu0
    %v568 = vadd.f32 0.0, %v567
    %v569 = vpop.f32.mrb[0].mxu0
    %570 = vdwg.mxu0
    %571 = vmatprep.subr.mxu0 0.0
    %572 = vmatpush1.msra.mxu0 %v485
    %573 = vmatprep.subr.mxu0 0.0
    %574 = vmatpush1.msra.mxu0 %v486
    %575 = vmatprep.subr.mxu0 0.0
    %576 = vmatpush1.msra.mxu0 %v487
    %577 = vmatprep.subr.mxu0 0.0
    %578 = vmatpush1.msra.mxu0 %v488
    %579 = vmatprep.subr.mxu0 0.0
    %580 = vmatpush1.msra.mxu0 %v489
    %581 = vmatprep.subr.mxu0 0.0
    %582 = vmatpush1.msra.mxu0 %v490
    %583 = vmatprep.subr.mxu0 0.0
    %584 = vmatpush1.msra.mxu0 %v491
    %585 = vmatprep.subr.mxu0 0.0
    %586 = vmatpush1.msra.mxu0 %v492
    %587 = vmatprep.subr.mxu0 0.0
    %588 = vmatpush1.msra.mxu0 %v493
    %589 = vmatprep.subr.mxu0 0.0
    %590 = vmatpush1.msra.mxu0 %v494
    %591 = vmatprep.subr.mxu0 0.0
    %592 = vmatpush1.msra.mxu0 %v495
    %593 = vmatprep.subr.mxu0 0.0
    %594 = vmatpush1.msra.mxu0 %v496
    %595 = vmatprep.subr.mxu0 0.0
    %596 = vmatpush1.msra.mxu0 %v497
    %597 = vmatprep.subr.mxu0 0.0
    %598 = vmatpush1.msra.mxu0 %v498
    %599 = vmatprep.subr.mxu0 0.0
    %600 = vmatpush1.msra.mxu0 %v499
    %601 = vmatprep.subr.mxu0 0.0
    %602 = vmatpush1.msra.mxu0 %v500
    %603 = vmatprep.subr.mxu0 0.0
    %604 = vmatpush1.msra.mxu0 0.0
    %605 = vmatprep.subr.mxu0 0.0
    %606 = vmatpush1.msra.mxu0 0.0
    %607 = vmatprep.subr.mxu0 0.0
    %608 = vmatpush1.msra.mxu0 0.0
    %609 = vmatprep.subr.mxu0 0.0
    %610 = vmatpush1.msra.mxu0 0.0
    %611 = vmatprep.subr.mxu0 0.0
    %612 = vmatpush1.msra.mxu0 0.0
    %613 = vmatprep.subr.mxu0 0.0
    %614 = vmatpush1.msra.mxu0 0.0
    %615 = vmatprep.subr.mxu0 0.0
    %616 = vmatpush1.msra.mxu0 0.0
    %617 = vmatprep.subr.mxu0 0.0
    %618 = vmatpush1.msra.mxu0 0.0
    %619 = vmatprep.subr.mxu0 0.0
    %620 = vmatpush1.msra.mxu0 0.0
    %621 = vmatprep.subr.mxu0 0.0
    %622 = vmatpush1.msra.mxu0 0.0
    %623 = vmatprep.subr.mxu0 0.0
    %624 = vmatpush1.msra.mxu0 0.0
    %625 = vmatprep.subr.mxu0 0.0
    %626 = vmatpush1.msra.mxu0 0.0
    %627 = vmatprep.subr.mxu0 0.0
    %628 = vmatpush1.msra.mxu0 0.0
    %629 = vmatprep.subr.mxu0 0.0
    %630 = vmatpush1.msra.mxu0 0.0
    %631 = vmatprep.subr.mxu0 0.0
    %632 = vmatpush1.msra.mxu0 0.0
    %633 = vmatprep.subr.mxu0 0.0
    %634 = vmatpush1.msra.mxu0 0.0
    %635 = vmatprep.mubr.f32.mxu0 0.0
    %636 = vmatmul.mubr.f32.gmra.mrb[0].mxu0 %v484
    %v637 = vpop.f32.mrb[0].mxu0
    %v638 = vadd.f32 0.0, %v637
    %v639 = vpop.f32.mrb[0].mxu0
    %640 = vdwg.mxu0
    %v641 = vmul.f32 %v568, 0.001953125
    %v642 = vmul.f32 %v638, 0.001953125
    %v643 = vmul.f32 %v641, %v641
    %v644 = vsub.f32 %v642, %v643
    %v645 = vadd.f32 %v644, 1e-05
    %v646 = vrsqrt.pop %v645
    %v647 = vmul.f32 %v461, %v646
    %v648 = vmul.f32 %v641, %v647
    %v649 = vsub.f32 %v462, %v648
    %v651 = vlaneseq
    %v652 = vshrl.u32 %v651, 7
    %v653 = vsub.s32 0, %v652
    %v654 = vrot.slane %v647, %v653
    %v656 = vmul.f32 %v457, %v654
    %v657 = vmul.f32 %v458, %v654
    %v658 = vmul.f32 %v459, %v654
    %v659 = vmul.f32 %v460, %v654
    %v661 = vlaneseq
    %v662 = vshrl.u32 %v661, 7
    %v663 = vsub.s32 0, %v662
    %v664 = vrot.slane %v649, %v663
    %v666 = vadd.f32 %v656, %v664
    %v667 = vadd.f32 %v657, %v664
    %v668 = vadd.f32 %v658, %v664
    %v669 = vadd.f32 %v659, %v664
    %v670 = vmax.f32 %v666, 0.0
    %v671 = vmax.f32 %v667, 0.0
    %v672 = vmax.f32 %v668, 0.0
    %v673 = vmax.f32 %v669, 0.0
    %674 = vst [vmem:[#allocation2 + $0x1] sm:$0xff] %v670
    %675 = vst [vmem:[#allocation2 + $0x9] sm:$0xff] %v671
    %676 = vst [vmem:[#allocation2 + $0x19] sm:$0xff] %v672
    %677 = vst [vmem:[#allocation2 + $0x21] sm:$0xff] %v673
    %v678 = vld [vmem:[#allocation2] sm:$0xff]
    %v679 = vld [vmem:[#allocation2 + $0x8] sm:$0xff]
    %v680 = vld [vmem:[#allocation2 + $0x18] sm:$0xff]
    %v681 = vld [vmem:[#allocation2 + $0x20] sm:$0xff]
    %v682 = vpack.c.bf16 %v679, %v678
    %v683 = vpack.c.bf16 %v681, %v680
    %v684 = vld [vmem:[#allocation8] sm:$0xf]
    %v685 = vld [vmem:[#allocation8 + $0x4] sm:$0xf]
    %v686 = vld [vmem:[#allocation8 + $0x8] sm:$0xf]
    %v687 = vld [vmem:[#allocation8 + $0xc] sm:$0xf]
    %v688 = vld [vmem:[#allocation8 + $0x10] sm:$0xf]
    %v689 = vld [vmem:[#allocation8 + $0x14] sm:$0xf]
    %v690 = vld [vmem:[#allocation8 + $0x18] sm:$0xf]
    %v691 = vld [vmem:[#allocation8 + $0x1c] sm:$0xf]
    %v692 = vld [vmem:[#allocation8 + $0x20] sm:$0xf]
    %v693 = vld [vmem:[#allocation8 + $0x24] sm:$0xf]
    %v694 = vld [vmem:[#allocation8 + $0x28] sm:$0xf]
    %v695 = vld [vmem:[#allocation8 + $0x2c] sm:$0xf]
    %v696 = vld [vmem:[#allocation8 + $0x30] sm:$0xf]
    %v697 = vld [vmem:[#allocation8 + $0x34] sm:$0xf]
    %v698 = vld [vmem:[#allocation8 + $0x38] sm:$0xf]
    %v699 = vld [vmem:[#allocation8 + $0x3c] sm:$0xf]
    %v700 = vld [vmem:[#allocation2 + $0x1] sm:$0xff]
    %v701 = vld [vmem:[#allocation2 + $0x9] sm:$0xff]
    %v702 = vld [vmem:[#allocation2 + $0x19] sm:$0xff]
    %v703 = vld [vmem:[#allocation2 + $0x21] sm:$0xff]
    %v704 = vpack.c.bf16 %v701, %v700
    %v705 = vpack.c.bf16 %v703, %v702
    %s706 = scalar_lea.vmem [#allocation8], 64
    %v707 = vld [vmem:[%s706] sm:$0xf]
    %v708 = vld [vmem:[%s706 + $0x4] sm:$0xf]
    %v709 = vld [vmem:[%s706 + $0x8] sm:$0xf]
    %v710 = vld [vmem:[%s706 + $0xc] sm:$0xf]
    %v711 = vld [vmem:[%s706 + $0x10] sm:$0xf]
    %v712 = vld [vmem:[%s706 + $0x14] sm:$0xf]
    %v713 = vld [vmem:[%s706 + $0x18] sm:$0xf]
    %v714 = vld [vmem:[%s706 + $0x1c] sm:$0xf]
    %v715 = vld [vmem:[%s706 + $0x20] sm:$0xf]
    %v716 = vld [vmem:[%s706 + $0x24] sm:$0xf]
    %v717 = vld [vmem:[%s706 + $0x28] sm:$0xf]
    %v718 = vld [vmem:[%s706 + $0x2c] sm:$0xf]
    %v719 = vld [vmem:[%s706 + $0x30] sm:$0xf]
    %v720 = vld [vmem:[%s706 + $0x34] sm:$0xf]
    %v721 = vld [vmem:[%s706 + $0x38] sm:$0xf]
    %v722 = vld [vmem:[%s706 + $0x3c] sm:$0xf]
    %v739 = vunpack.c.l.b16 %v707
    %v740 = vunpack.c.l.b16 %v708
    %v741 = vunpack.c.l.b16 %v709
    %v742 = vunpack.c.l.b16 %v710
    %v743 = vunpack.c.l.b16 %v711
    %v744 = vunpack.c.l.b16 %v712
    %v745 = vunpack.c.l.b16 %v713
    %v746 = vunpack.c.l.b16 %v714
    %v747 = vunpack.c.l.b16 %v715
    %v748 = vunpack.c.l.b16 %v716
    %v749 = vunpack.c.l.b16 %v717
    %v750 = vunpack.c.l.b16 %v718
    %v751 = vunpack.c.l.b16 %v719
    %v752 = vunpack.c.l.b16 %v720
    %v753 = vunpack.c.l.b16 %v721
    %v754 = vunpack.c.l.b16 %v722
    %v755 = vpack.c.b16 %v740, %v739
    %v756 = vpack.c.b16 %v742, %v741
    %v757 = vpack.c.b16 %v744, %v743
    %v758 = vpack.c.b16 %v746, %v745
    %v759 = vpack.c.b16 %v748, %v747
    %v760 = vpack.c.b16 %v750, %v749
    %v761 = vpack.c.b16 %v752, %v751
    %v762 = vpack.c.b16 %v754, %v753
    %771 = vmatprep.subr.bf16.mxu0 0
    %772 = vmatpush1.bf16.msra.mxu0 %v755
    %773 = vmatprep.subr.bf16.mxu0 0
    %774 = vmatpush1.bf16.msra.mxu0 %v756
    %775 = vmatprep.subr.bf16.mxu0 0
    %776 = vmatpush1.bf16.msra.mxu0 %v757
    %777 = vmatprep.subr.bf16.mxu0 0
    %778 = vmatpush1.bf16.msra.mxu0 %v758
    %779 = vmatprep.subr.bf16.mxu0 0
    %780 = vmatpush1.bf16.msra.mxu0 %v759
    %781 = vmatprep.subr.bf16.mxu0 0
    %782 = vmatpush1.bf16.msra.mxu0 %v760
    %783 = vmatprep.subr.bf16.mxu0 0
    %784 = vmatpush1.bf16.msra.mxu0 %v761
    %785 = vmatprep.subr.bf16.mxu0 0
    %786 = vmatpush1.bf16.msra.mxu0 %v762
    %787 = vmatprep.subr.bf16.mxu0 0
    %788 = vmatpush1.bf16.msra.mxu0 0
    %789 = vmatprep.subr.bf16.mxu0 0
    %790 = vmatpush1.bf16.msra.mxu0 0
    %791 = vmatprep.subr.bf16.mxu0 0
    %792 = vmatpush1.bf16.msra.mxu0 0
    %793 = vmatprep.subr.bf16.mxu0 0
    %794 = vmatpush1.bf16.msra.mxu0 0
    %795 = vmatprep.subr.bf16.mxu0 0
    %796 = vmatpush1.bf16.msra.mxu0 0
    %797 = vmatprep.subr.bf16.mxu0 0
    %798 = vmatpush1.bf16.msra.mxu0 0
    %799 = vmatprep.subr.bf16.mxu0 0
    %800 = vmatpush1.bf16.msra.mxu0 0
    %801 = vmatprep.subr.bf16.mxu0 0
    %802 = vmatpush1.bf16.msra.mxu0 0
    %803 = vmatprep.mubr.bf16.mxu0 0
    %804 = vmatmul.mubr.bf16.gmra.mrb[0].mxu0 %v704
    %v805 = vpop.f32.mrb[0].mxu0
    %v806 = vadd.f32 0.0, %v805
    %v807 = vpop.f32.mrb[0].mxu0
    %v808 = vpop.f32.mrb[0].mxu0
    %v809 = vadd.f32 0.0, %v808
    %v810 = vpop.f32.mrb[0].mxu0
    %811 = vmatprep.mubr.bf16.mxu0 0
    %812 = vmatmul.mubr.bf16.gmra.mrb[0].mxu0 %v705
    %v813 = vpop.f32.mrb[0].mxu0
    %v814 = vadd.f32 0.0, %v813
    %v815 = vpop.f32.mrb[0].mxu0
    %v816 = vpop.f32.mrb[0].mxu0
    %v817 = vadd.f32 0.0, %v816
    %v818 = vpop.f32.mrb[0].mxu0
    %819 = vdwg.mxu0
    %v836 = vunpack.c.l.b16 %v684
    %v837 = vunpack.c.l.b16 %v685
    %v838 = vunpack.c.l.b16 %v686
    %v839 = vunpack.c.l.b16 %v687
    %v840 = vunpack.c.l.b16 %v688
    %v841 = vunpack.c.l.b16 %v689
    %v842 = vunpack.c.l.b16 %v690
    %v843 = vunpack.c.l.b16 %v691
    %v844 = vunpack.c.l.b16 %v692
    %v845 = vunpack.c.l.b16 %v693
    %v846 = vunpack.c.l.b16 %v694
    %v847 = vunpack.c.l.b16 %v695
    %v848 = vunpack.c.l.b16 %v696
    %v849 = vunpack.c.l.b16 %v697
    %v850 = vunpack.c.l.b16 %v698
    %v851 = vunpack.c.l.b16 %v699
    %v852 = vpack.c.b16 %v837, %v836
    %v853 = vpack.c.b16 %v839, %v838
    %v854 = vpack.c.b16 %v841, %v840
    %v855 = vpack.c.b16 %v843, %v842
    %v856 = vpack.c.b16 %v845, %v844
    %v857 = vpack.c.b16 %v847, %v846
    %v858 = vpack.c.b16 %v849, %v848
    %v859 = vpack.c.b16 %v851, %v850
    %868 = vmatprep.subr.bf16.mxu0 0
    %869 = vmatpush1.bf16.msra.mxu0 %v852
    %870 = vmatprep.subr.bf16.mxu0 0
    %871 = vmatpush1.bf16.msra.mxu0 %v853
    %872 = vmatprep.subr.bf16.mxu0 0
    %873 = vmatpush1.bf16.msra.mxu0 %v854
    %874 = vmatprep.subr.bf16.mxu0 0
    %875 = vmatpush1.bf16.msra.mxu0 %v855
    %876 = vmatprep.subr.bf16.mxu0 0
    %877 = vmatpush1.bf16.msra.mxu0 %v856
    %878 = vmatprep.subr.bf16.mxu0 0
    %879 = vmatpush1.bf16.msra.mxu0 %v857
    %880 = vmatprep.subr.bf16.mxu0 0
    %881 = vmatpush1.bf16.msra.mxu0 %v858
    %882 = vmatprep.subr.bf16.mxu0 0
    %883 = vmatpush1.bf16.msra.mxu0 %v859
    %884 = vmatprep.subr.bf16.mxu0 0
    %885 = vmatpush1.bf16.msra.mxu0 0
    %886 = vmatprep.subr.bf16.mxu0 0
    %887 = vmatpush1.bf16.msra.mxu0 0
    %888 = vmatprep.subr.bf16.mxu0 0
    %889 = vmatpush1.bf16.msra.mxu0 0
    %890 = vmatprep.subr.bf16.mxu0 0
    %891 = vmatpush1.bf16.msra.mxu0 0
    %892 = vmatprep.subr.bf16.mxu0 0
    %893 = vmatpush1.bf16.msra.mxu0 0
    %894 = vmatprep.subr.bf16.mxu0 0
    %895 = vmatpush1.bf16.msra.mxu0 0
    %896 = vmatprep.subr.bf16.mxu0 0
    %897 = vmatpush1.bf16.msra.mxu0 0
    %898 = vmatprep.subr.bf16.mxu0 0
    %899 = vmatpush1.bf16.msra.mxu0 0
    %900 = vmatprep.mubr.bf16.mxu0 0
    %901 = vmatmul.mubr.bf16.gmra.mrb[0].mxu0 %v682
    %v902 = vpop.f32.mrb[0].mxu0
    %v903 = vadd.f32 %v806, %v902
    %v904 = vpop.f32.mrb[0].mxu0
    %v905 = vpop.f32.mrb[0].mxu0
    %v906 = vadd.f32 %v809, %v905
    %v907 = vpop.f32.mrb[0].mxu0
    %908 = vmatprep.mubr.bf16.mxu0 0
    %909 = vmatmul.mubr.bf16.gmra.mrb[0].mxu0 %v683
    %v910 = vpop.f32.mrb[0].mxu0
    %v911 = vadd.f32 %v814, %v910
    %v912 = vpop.f32.mrb[0].mxu0
    %v913 = vpop.f32.mrb[0].mxu0
    %v914 = vadd.f32 %v817, %v913
    %v915 = vpop.f32.mrb[0].mxu0
    %916 = vdwg.mxu0
    %v917 = vld [vmem:[#allocation2 + $0x2] sm:$0xff]
    %v918 = vld [vmem:[#allocation2 + $0xa] sm:$0xff]
    %v919 = vld [vmem:[#allocation2 + $0x1a] sm:$0xff]
    %v920 = vld [vmem:[#allocation2 + $0x22] sm:$0xff]
    %v921 = vpack.c.bf16 %v918, %v917
    %v922 = vpack.c.bf16 %v920, %v919
    %s923 = scalar_lea.vmem [#allocation8], 128
    %v924 = vld [vmem:[%s923] sm:$0xf]
    %v925 = vld [vmem:[%s923 + $0x4] sm:$0xf]
    %v926 = vld [vmem:[%s923 + $0x8] sm:$0xf]
    %v927 = vld [vmem:[%s923 + $0xc] sm:$0xf]
    %v928 = vld [vmem:[%s923 + $0x10] sm:$0xf]
    %v929 = vld [vmem:[%s923 + $0x14] sm:$0xf]
    %v930 = vld [vmem:[%s923 + $0x18] sm:$0xf]
    %v931 = vld [vmem:[%s923 + $0x1c] sm:$0xf]
    %v932 = vld [vmem:[%s923 + $0x20] sm:$0xf]
    %v933 = vld [vmem:[%s923 + $0x24] sm:$0xf]
    %v934 = vld [vmem:[%s923 + $0x28] sm:$0xf]
    %v935 = vld [vmem:[%s923 + $0x2c] sm:$0xf]
    %v936 = vld [vmem:[%s923 + $0x30] sm:$0xf]
    %v937 = vld [vmem:[%s923 + $0x34] sm:$0xf]
    %v938 = vld [vmem:[%s923 + $0x38] sm:$0xf]
    %v939 = vld [vmem:[%s923 + $0x3c] sm:$0xf]
    %v956 = vunpack.c.l.b16 %v924
    %v957 = vunpack.c.l.b16 %v925
    %v958 = vunpack.c.l.b16 %v926
    %v959 = vunpack.c.l.b16 %v927
    %v960 = vunpack.c.l.b16 %v928
    %v961 = vunpack.c.l.b16 %v929
    %v962 = vunpack.c.l.b16 %v930
    %v963 = vunpack.c.l.b16 %v931
    %v964 = vunpack.c.l.b16 %v932
    %v965 = vunpack.c.l.b16 %v933
    %v966 = vunpack.c.l.b16 %v934
    %v967 = vunpack.c.l.b16 %v935
    %v968 = vunpack.c.l.b16 %v936
    %v969 = vunpack.c.l.b16 %v937
    %v970 = vunpack.c.l.b16 %v938
    %v971 = vunpack.c.l.b16 %v939
    %v972 = vpack.c.b16 %v957, %v956
    %v973 = vpack.c.b16 %v959, %v958
    %v974 = vpack.c.b16 %v961, %v960
    %v975 = vpack.c.b16 %v963, %v962
    %v976 = vpack.c.b16 %v965, %v964
    %v977 = vpack.c.b16 %v967, %v966
    %v978 = vpack.c.b16 %v969, %v968
    %v979 = vpack.c.b16 %v971, %v970
    %988 = vmatprep.subr.bf16.mxu0 0
    %989 = vmatpush1.bf16.msra.mxu0 %v972
    %990 = vmatprep.subr.bf16.mxu0 0
    %991 = vmatpush1.bf16.msra.mxu0 %v973
    %992 = vmatprep.subr.bf16.mxu0 0
    %993 = vmatpush1.bf16.msra.mxu0 %v974
    %994 = vmatprep.subr.bf16.mxu0 0
    %995 = vmatpush1.bf16.msra.mxu0 %v975
    %996 = vmatprep.subr.bf16.mxu0 0
    %997 = vmatpush1.bf16.msra.mxu0 %v976
    %998 = vmatprep.subr.bf16.mxu0 0
    %999 = vmatpush1.bf16.msra.mxu0 %v977
    %1000 = vmatprep.subr.bf16.mxu0 0
    %1001 = vmatpush1.bf16.msra.mxu0 %v978
    %1002 = vmatprep.subr.bf16.mxu0 0
    %1003 = vmatpush1.bf16.msra.mxu0 %v979
    %1004 = vmatprep.subr.bf16.mxu0 0
    %1005 = vmatpush1.bf16.msra.mxu0 0
    %1006 = vmatprep.subr.bf16.mxu0 0
    %1007 = vmatpush1.bf16.msra.mxu0 0
    %1008 = vmatprep.subr.bf16.mxu0 0
    %1009 = vmatpush1.bf16.msra.mxu0 0
    %1010 = vmatprep.subr.bf16.mxu0 0
    %1011 = vmatpush1.bf16.msra.mxu0 0
    %1012 = vmatprep.subr.bf16.mxu0 0
    %1013 = vmatpush1.bf16.msra.mxu0 0
    %1014 = vmatprep.subr.bf16.mxu0 0
    %1015 = vmatpush1.bf16.msra.mxu0 0
    %1016 = vmatprep.subr.bf16.mxu0 0
    %1017 = vmatpush1.bf16.msra.mxu0 0
    %1018 = vmatprep.subr.bf16.mxu0 0
    %1019 = vmatpush1.bf16.msra.mxu0 0
    %1020 = vmatprep.mubr.bf16.mxu0 0
    %1021 = vmatmul.mubr.bf16.gmra.mrb[0].mxu0 %v921
    %v1022 = vpop.f32.mrb[0].mxu0
    %v1023 = vadd.f32 0.0, %v1022
    %v1024 = vpop.f32.mrb[0].mxu0
    %v1025 = vpop.f32.mrb[0].mxu0
    %v1026 = vadd.f32 0.0, %v1025
    %v1027 = vpop.f32.mrb[0].mxu0
    %1028 = vmatprep.mubr.bf16.mxu0 0
    %1029 = vmatmul.mubr.bf16.gmra.mrb[0].mxu0 %v922
    %v1030 = vpop.f32.mrb[0].mxu0
    %v1031 = vadd.f32 0.0, %v1030
    %v1032 = vpop.f32.mrb[0].mxu0
    %v1033 = vpop.f32.mrb[0].mxu0
    %v1034 = vadd.f32 0.0, %v1033
    %v1035 = vpop.f32.mrb[0].mxu0
    %1036 = vdwg.mxu0
    %v1037 = vadd.f32 %v903, %v1023
    %v1038 = vadd.f32 %v906, %v1026
    %v1039 = vadd.f32 %v911, %v1031
    %v1040 = vadd.f32 %v914, %v1034
    %v1041 = vld [vmem:[%s5] sm:$0x1]
    %v1042 = vld [vmem:[%s6] sm:$0x1]
    %v1043 = vadd.f32 %v1037, %v1038
    %v1044 = vadd.f32 %v1043, %v1039
    %v1045 = vadd.f32 %v1044, %v1040
    %v1046 = vrot.slane %v1045, 4
    %v1047 = vadd.f32 %v1045, %v1046
    %v1048 = vrot.slane %v1047, 2
    %v1049 = vadd.f32 %v1047, %v1048
    %v1050 = vrot.slane %v1049, 1
    %v1051 = vadd.f32 %v1049, %v1050
    %v1052 = vmul.f32 %v1037, %v1037
    %v1053 = vmul.f32 %v1038, %v1038
    %v1054 = vmul.f32 %v1039, %v1039
    %v1055 = vmul.f32 %v1040, %v1040
    %v1056 = vadd.f32 %v1052, %v1053
    %v1057 = vadd.f32 %v1056, %v1054
    %v1058 = vadd.f32 %v1057, %v1055
    %v1059 = vrot.slane %v1058, 4
    %v1060 = vadd.f32 %v1058, %v1059
    %v1061 = vrot.slane %v1060, 2
    %v1062 = vadd.f32 %v1060, %v1061
    %v1063 = vrot.slane %v1062, 1
    %v1064 = vadd.f32 %v1062, %v1063
    %v1065 = vld [vmem:[#allocation9] sm:$0xff]
    %v1066 = vld [vmem:[#allocation9 + $0x8] sm:$0xff]
    %v1067 = vld [vmem:[#allocation9 + $0x10] sm:$0xff]
    %v1068 = vld [vmem:[#allocation9 + $0x18] sm:$0xff]
    %v1069 = vld [vmem:[#allocation9 + $0x20] sm:$0xff]
    %v1070 = vld [vmem:[#allocation9 + $0x28] sm:$0xff]
    %v1071 = vld [vmem:[#allocation9 + $0x30] sm:$0xff]
    %v1072 = vld [vmem:[#allocation9 + $0x38] sm:$0xff]
    %v1073 = vld [vmem:[#allocation9 + $0x40] sm:$0xff]
    %v1074 = vld [vmem:[#allocation9 + $0x48] sm:$0xff]
    %v1075 = vld [vmem:[#allocation9 + $0x50] sm:$0xff]
    %v1076 = vld [vmem:[#allocation9 + $0x58] sm:$0xff]
    %v1077 = vld [vmem:[#allocation9 + $0x60] sm:$0xff]
    %v1078 = vld [vmem:[#allocation9 + $0x68] sm:$0xff]
    %v1079 = vld [vmem:[#allocation9 + $0x70] sm:$0xff]
    %v1080 = vld [vmem:[#allocation9 + $0x78] sm:$0xff]
    %1081 = vmatprep.subr.mxu0 0.0
    %1082 = vmatpush1.msra.mxu0 %v1065
    %1083 = vmatprep.subr.mxu0 0.0
    %1084 = vmatpush1.msra.mxu0 %v1066
    %1085 = vmatprep.subr.mxu0 0.0
    %1086 = vmatpush1.msra.mxu0 %v1067
    %1087 = vmatprep.subr.mxu0 0.0
    %1088 = vmatpush1.msra.mxu0 %v1068
    %1089 = vmatprep.subr.mxu0 0.0
    %1090 = vmatpush1.msra.mxu0 %v1069
    %1091 = vmatprep.subr.mxu0 0.0
    %1092 = vmatpush1.msra.mxu0 %v1070
    %1093 = vmatprep.subr.mxu0 0.0
    %1094 = vmatpush1.msra.mxu0 %v1071
    %1095 = vmatprep.subr.mxu0 0.0
    %1096 = vmatpush1.msra.mxu0 %v1072
    %1097 = vmatprep.subr.mxu0 0.0
    %1098 = vmatpush1.msra.mxu0 %v1073
    %1099 = vmatprep.subr.mxu0 0.0
    %1100 = vmatpush1.msra.mxu0 %v1074
    %1101 = vmatprep.subr.mxu0 0.0
    %1102 = vmatpush1.msra.mxu0 %v1075
    %1103 = vmatprep.subr.mxu0 0.0
    %1104 = vmatpush1.msra.mxu0 %v1076
    %1105 = vmatprep.subr.mxu0 0.0
    %1106 = vmatpush1.msra.mxu0 %v1077
    %1107 = vmatprep.subr.mxu0 0.0
    %1108 = vmatpush1.msra.mxu0 %v1078
    %1109 = vmatprep.subr.mxu0 0.0
    %1110 = vmatpush1.msra.mxu0 %v1079
    %1111 = vmatprep.subr.mxu0 0.0
    %1112 = vmatpush1.msra.mxu0 %v1080
    %1113 = vmatprep.subr.mxu0 0.0
    %1114 = vmatpush1.msra.mxu0 0.0
    %1115 = vmatprep.subr.mxu0 0.0
    %1116 = vmatpush1.msra.mxu0 0.0
    %1117 = vmatprep.subr.mxu0 0.0
    %1118 = vmatpush1.msra.mxu0 0.0
    %1119 = vmatprep.subr.mxu0 0.0
    %1120 = vmatpush1.msra.mxu0 0.0
    %1121 = vmatprep.subr.mxu0 0.0
    %1122 = vmatpush1.msra.mxu0 0.0
    %1123 = vmatprep.subr.mxu0 0.0
    %1124 = vmatpush1.msra.mxu0 0.0
    %1125 = vmatprep.subr.mxu0 0.0
    %1126 = vmatpush1.msra.mxu0 0.0
    %1127 = vmatprep.subr.mxu0 0.0
    %1128 = vmatpush1.msra.mxu0 0.0
    %1129 = vmatprep.subr.mxu0 0.0
    %1130 = vmatpush1.msra.mxu0 0.0
    %1131 = vmatprep.subr.mxu0 0.0
    %1132 = vmatpush1.msra.mxu0 0.0
    %1133 = vmatprep.subr.mxu0 0.0
    %1134 = vmatpush1.msra.mxu0 0.0
    %1135 = vmatprep.subr.mxu0 0.0
    %1136 = vmatpush1.msra.mxu0 0.0
    %1137 = vmatprep.subr.mxu0 0.0
    %1138 = vmatpush1.msra.mxu0 0.0
    %1139 = vmatprep.subr.mxu0 0.0
    %1140 = vmatpush1.msra.mxu0 0.0
    %1141 = vmatprep.subr.mxu0 0.0
    %1142 = vmatpush1.msra.mxu0 0.0
    %1143 = vmatprep.subr.mxu0 0.0
    %1144 = vmatpush1.msra.mxu0 0.0
    %1145 = vmatprep.mubr.f32.mxu0 0.0
    %1146 = vmatmul.mubr.f32.gmra.mrb[0].mxu0 %v1051
    %v1147 = vpop.f32.mrb[0].mxu0
    %v1148 = vadd.f32 0.0, %v1147
    %v1149 = vpop.f32.mrb[0].mxu0
    %1150 = vdwg.mxu0
    %1151 = vmatprep.subr.mxu0 0.0
    %1152 = vmatpush1.msra.mxu0 %v1065
    %1153 = vmatprep.subr.mxu0 0.0
    %1154 = vmatpush1.msra.mxu0 %v1066
    %1155 = vmatprep.subr.mxu0 0.0
    %1156 = vmatpush1.msra.mxu0 %v1067
    %1157 = vmatprep.subr.mxu0 0.0
    %1158 = vmatpush1.msra.mxu0 %v1068
    %1159 = vmatprep.subr.mxu0 0.0
    %1160 = vmatpush1.msra.mxu0 %v1069
    %1161 = vmatprep.subr.mxu0 0.0
    %1162 = vmatpush1.msra.mxu0 %v1070
    %1163 = vmatprep.subr.mxu0 0.0
    %1164 = vmatpush1.msra.mxu0 %v1071
    %1165 = vmatprep.subr.mxu0 0.0
    %1166 = vmatpush1.msra.mxu0 %v1072
    %1167 = vmatprep.subr.mxu0 0.0
    %1168 = vmatpush1.msra.mxu0 %v1073
    %1169 = vmatprep.subr.mxu0 0.0
    %1170 = vmatpush1.msra.mxu0 %v1074
    %1171 = vmatprep.subr.mxu0 0.0
    %1172 = vmatpush1.msra.mxu0 %v1075
    %1173 = vmatprep.subr.mxu0 0.0
    %1174 = vmatpush1.msra.mxu0 %v1076
    %1175 = vmatprep.subr.mxu0 0.0
    %1176 = vmatpush1.msra.mxu0 %v1077
    %1177 = vmatprep.subr.mxu0 0.0
    %1178 = vmatpush1.msra.mxu0 %v1078
    %1179 = vmatprep.subr.mxu0 0.0
    %1180 = vmatpush1.msra.mxu0 %v1079
    %1181 = vmatprep.subr.mxu0 0.0
    %1182 = vmatpush1.msra.mxu0 %v1080
    %1183 = vmatprep.subr.mxu0 0.0
    %1184 = vmatpush1.msra.mxu0 0.0
    %1185 = vmatprep.subr.mxu0 0.0
    %1186 = vmatpush1.msra.mxu0 0.0
    %1187 = vmatprep.subr.mxu0 0.0
    %1188 = vmatpush1.msra.mxu0 0.0
    %1189 = vmatprep.subr.mxu0 0.0
    %1190 = vmatpush1.msra.mxu0 0.0
    %1191 = vmatprep.subr.mxu0 0.0
    %1192 = vmatpush1.msra.mxu0 0.0
    %1193 = vmatprep.subr.mxu0 0.0
    %1194 = vmatpush1.msra.mxu0 0.0
    %1195 = vmatprep.subr.mxu0 0.0
    %1196 = vmatpush1.msra.mxu0 0.0
    %1197 = vmatprep.subr.mxu0 0.0
    %1198 = vmatpush1.msra.mxu0 0.0
    %1199 = vmatprep.subr.mxu0 0.0
    %1200 = vmatpush1.msra.mxu0 0.0
    %1201 = vmatprep.subr.mxu0 0.0
    %1202 = vmatpush1.msra.mxu0 0.0
    %1203 = vmatprep.subr.mxu0 0.0
    %1204 = vmatpush1.msra.mxu0 0.0
    %1205 = vmatprep.subr.mxu0 0.0
    %1206 = vmatpush1.msra.mxu0 0.0
    %1207 = vmatprep.subr.mxu0 0.0
    %1208 = vmatpush1.msra.mxu0 0.0
    %1209 = vmatprep.subr.mxu0 0.0
    %1210 = vmatpush1.msra.mxu0 0.0
    %1211 = vmatprep.subr.mxu0 0.0
    %1212 = vmatpush1.msra.mxu0 0.0
    %1213 = vmatprep.subr.mxu0 0.0
    %1214 = vmatpush1.msra.mxu0 0.0
    %1215 = vmatprep.mubr.f32.mxu0 0.0
    %1216 = vmatmul.mubr.f32.gmra.mrb[0].mxu0 %v1064
    %v1217 = vpop.f32.mrb[0].mxu0
    %v1218 = vadd.f32 0.0, %v1217
    %v1219 = vpop.f32.mrb[0].mxu0
    %1220 = vdwg.mxu0
    %v1221 = vmul.f32 %v1148, 0.001953125
    %v1222 = vmul.f32 %v1218, 0.001953125
    %v1223 = vmul.f32 %v1221, %v1221
    %v1224 = vsub.f32 %v1222, %v1223
    %v1225 = vadd.f32 %v1224, 1e-05
    %v1226 = vrsqrt.pop %v1225
    %v1227 = vmul.f32 %v1041, %v1226
    %v1228 = vmul.f32 %v1221, %v1227
    %v1229 = vsub.f32 %v1042, %v1228
    %v1231 = vlaneseq
    %v1232 = vshrl.u32 %v1231, 7
    %v1233 = vsub.s32 0, %v1232
    %v1234 = vrot.slane %v1227, %v1233
    %v1236 = vmul.f32 %v1037, %v1234
    %v1237 = vmul.f32 %v1038, %v1234
    %v1238 = vmul.f32 %v1039, %v1234
    %v1239 = vmul.f32 %v1040, %v1234
    %v1241 = vlaneseq
    %v1242 = vshrl.u32 %v1241, 7
    %v1243 = vsub.s32 0, %v1242
    %v1244 = vrot.slane %v1229, %v1243
    %v1246 = vadd.f32 %v1236, %v1244
    %v1247 = vadd.f32 %v1237, %v1244
    %v1248 = vadd.f32 %v1238, %v1244
    %v1249 = vadd.f32 %v1239, %v1244
    %v1250 = vadd.f32 %v90, %v1246
    %v1251 = vadd.f32 %v91, %v1247
    %v1252 = vadd.f32 %v92, %v1248
    %v1253 = vadd.f32 %v93, %v1249
    %v1254 = vmax.f32 %v1250, 0.0
    %v1255 = vmax.f32 %v1251, 0.0
    %v1256 = vmax.f32 %v1252, 0.0
    %v1257 = vmax.f32 %v1253, 0.0
    %1258 = vst [vmem:[#allocation11] sm:$0xff] %v1254
    %1259 = vst [vmem:[#allocation11 + $0x8] sm:$0xff] %v1255
    %1260 = vst [vmem:[#allocation11 + $0x10] sm:$0xff] %v1256
    %1261 = vst [vmem:[#allocation11 + $0x18] sm:$0xff] %v1257
    // Predicated region
    $region50: #{tpu_custom_call.1} parent=1 // pred_check
      _
    $region51: #{tpu_custom_call.1} parent=1 // pred_check_branch
      %1263 = sbr.rel (0) target = $region53
    $region52: #{tpu_custom_call.1} parent=1 // pred_region
      %s1265 = ssub.s32 512, 512
      %1266 = vsyncadd [#allocation5], %s1265
      %s1267 = sshll.u32 [#allocation11], 4
      %s1268 = int_to_ptr.vmem [resolvable:$true] %s1267
      %1273 = dma.vmem_to_hbm [thread:$0]  %s1268, 512, %s8, [#allocation5], 128, 128, 8
    $region53: #{tpu_custom_call.1} parent=1 // pred_fallthru
      _
    // Predicated region
    $region54: #{tpu_custom_call.1} parent=1 // pred_check
      _
    $region55: #{tpu_custom_call.1} parent=1 // pred_check_branch
      %1275 = sbr.rel (0) target = $region57
    $region56: #{tpu_custom_call.1} parent=1 // pred_region
      %1276 = dma.done [#allocation5], 512
    $region57: #{tpu_custom_call.1} parent=1 // pred_fallthru
      _
    %1277 = vsyncpa [#allocation4], 1
    %1278 = vsyncpa [#allocation7], 1
    %1279 = vsyncpa [#allocation10], 1
    %1280 = vsyncpa [#allocation5], 1

</llo_original>
